<compile_context>
chip_gen: v7x
topology: tpu7x:2x2x1
jax: 0.10.0
libtpu: 0.0.40
codegen_flags: <defaults>
</compile_context>

<pallas_src>
import jax
import jax.numpy as jnp
import numpy as np
from jax import lax
from jax.experimental import pallas as pl
from jax.experimental.pallas import tpu as pltpu

# ---- static problem configuration (small synthetic shapes) ----
N_BATCH = 2
C_IN    = 8                      # channels per modality input
N_MOD   = 4                      # 4 modalities -> vision = first 2, sensor = last 2
C_TOTAL = C_IN * N_MOD           # 32 channels after concat (ChannelAttention "channel")
C_V     = C_IN * 2               # 16 vision channels (and 16 sensor channels)
RED     = 16                     # ChannelAttention reduction
C_MID   = C_TOTAL // RED         # 2 hidden channels in the SE MLP
H = W   = 7
K       = 7                      # SpatialAttention kernel size
P       = K // 2                 # padding = 3
HW      = H * W                  # 49

# ---- packed-parameter row offsets (all multiples of 8 -> aligned ref slices) ----
ROW_TOEP = 0                     # rows 0:196   block-Toeplitz (4*HW, 2*HW)
ROW_BIAS = 200                   # row  200     conv bias row (1, 2*HW)
ROW_W1   = 208                   # rows 208:210 SE conv #1 weight (C_MID, C_TOTAL)
ROW_EYE  = 216                   # rows 216:220 4x4 identity (transpose-by-matmul helper)
ROW_W2   = 224                   # rows 224:256 SE conv #2 weight (C_TOTAL, C_MID)
P_ROWS   = 256
P_COLS   = 2 * HW                # 98

_HI = lax.Precision.HIGHEST


def sc3_kernel(m0_ref, m1_ref, m2_ref, m3_ref, p_ref, out_ref):
    """Single gridless invocation, whole batch.

    m*_ref  : VMEM f32[N, C_IN, HW]   one modality each, spatial flattened onto the lane axis
    p_ref   : VMEM f32[256, 98]       packed params (block Toeplitz + bias row + SE weights + I4)
    out_ref : VMEM f32[2*N, C_TOTAL]  rows = [mire_s0, mire_s1, base_s0, base_s1]
    """
    f32 = jnp.float32

    def sigmoid(z):
        return pl.reciprocal(1.0 + jnp.exp(-z), approx=False)

    # ---- packed parameters (static, sublane-aligned ref slices; one DMA upstream) ----
    t_blk = p_ref[ROW_TOEP:ROW_TOEP + 4 * HW, :]                      # (196, 98)
    bias  = p_ref[ROW_BIAS:ROW_BIAS + 1, :]                           # (1, 98)
    w1    = p_ref[ROW_W1:ROW_W1 + C_MID, 0:C_TOTAL]                   # (2, 32)
    eye4  = p_ref[ROW_EYE:ROW_EYE + 2 * N_BATCH, 0:2 * N_BATCH]       # (4, 4)
    w2    = p_ref[ROW_W2:ROW_W2 + C_TOTAL, 0:C_MID]                   # (32, 2)

    inv_cv = 1.0 / C_V
    inv_hw = 1.0 / HW

    # ---- stage 1: per-sample channel max/mean maps, packed into ONE fused-conv LHS ----
    xb_all = []
    r_rows = []
    for b in range(N_BATCH):                                          # static unroll, N_BATCH == 2
        xb = jnp.concatenate([m0_ref[b], m1_ref[b], m2_ref[b], m3_ref[b]], axis=0)   # (32, 49)
        xb_all.append(xb)
        xv, xs = xb[:C_V], xb[C_V:]
        r_rows.append(jnp.concatenate(
            [jnp.max(xv, axis=0, keepdims=True),
             jnp.sum(xv, axis=0, keepdims=True) * inv_cv,
             jnp.max(xs, axis=0, keepdims=True),
             jnp.sum(xs, axis=0, keepdims=True) * inv_cv], axis=1))                   # (1, 196)
    r_all = jnp.concatenate(r_rows, axis=0)                                           # (2, 196)

    # ---- stage 2: BOTH 7x7 spatial-attention convs for BOTH samples: 1 matmul + 1 sigmoid ----
    gates = sigmoid(jnp.dot(r_all, t_blk, preferred_element_type=f32,
                            precision=_HI) + bias)                                    # (2, 98)

    # ---- stage 3: apply spatial gates; gather channel-pool columns for the fused SE ----
    out1_all = []
    pool_max = []
    pool_avg = []
    for b in range(N_BATCH):
        xb = xb_all[b]
        sig_v = gates[b:b + 1, 0:HW]                 # (1, 49)
        sig_s = gates[b:b + 1, HW:2 * HW]            # (1, 49)
        o1 = jnp.concatenate([xb[:C_V] * sig_v, xb[C_V:] * sig_s], axis=0)            # (32, 49)
        out1_all.append(o1)
        pool_max.append(jnp.max(o1, axis=-1, keepdims=True))                          # (32, 1)
        pool_avg.append(jnp.sum(o1, axis=-1, keepdims=True) * inv_hw)                 # (32, 1)
    pooled = jnp.concatenate(pool_max + pool_avg, axis=1)      # (32, 4) [max0,max1,avg0,avg1]

    # ---- stage 4: fused SE MLP over all samples x {max, avg}: 2 matmuls + 1 sigmoid ----
    hid = jnp.maximum(jnp.dot(w1, pooled, preferred_element_type=f32, precision=_HI), 0.0)   # (2, 4)
    se  = jnp.dot(w2, hid, preferred_element_type=f32, precision=_HI)                        # (32, 4)
    ca  = sigmoid(se[:, 0:N_BATCH] + se[:, N_BATCH:2 * N_BATCH])                             # (32, 2)

    # ---- stage 5: residual + pooling heads (all in vregs, no scratch) ----
    mire_cols = []
    base_cols = []
    for b in range(N_BATCH):
        xb = xb_all[b]
        o1 = out1_all[b] * ca[:, b:b + 1] + xb
        base = jnp.sum(xb, axis=-1, keepdims=True) * inv_hw        # AvgPool2d(7,7)      -> (32, 1)
        mire = jnp.max(o1, axis=-1, keepdims=True) + base          # AdaptiveMaxPool2d(1) -> (32, 1)
        mire_cols.append(mire)
        base_cols.append(base)
    cols = jnp.concatenate(mire_cols + base_cols, axis=1)          # (32, 4) [mire0,mire1,base0,base1]

    # Lane-dense output: transpose (32,4) -> (4,32) via one tiny MXU matmul against the packed
    # identity (contraction on the minor dims, the standard q@k.T pattern), then ONE store.
    rows = lax.dot_general(eye4, cols, (((1,), (1,)), ((), ())),
                           preferred_element_type=f32, precision=_HI)                 # (4, 32)
    out_ref[...] = rows


@jax.jit
def sc3_block_pallas(inputs, params):
    """inputs: list of 4 arrays (N, C_IN, H, W). Returns {'mire': (N, C_TOTAL), 'base': (N, C_TOTAL)}."""
    # Free metadata reshape only (contiguous trailing-dim collapse); NO concat / transpose ops.
    flat = [x.reshape(x.shape[0], C_IN, HW) for x in inputs]
    vmem = lambda: pl.BlockSpec(memory_space=pltpu.MemorySpace.VMEM)
    out = pl.pallas_call(
        sc3_kernel,
        out_shape=jax.ShapeDtypeStruct((2 * N_BATCH, C_TOTAL), jnp.float32),
        in_specs=[vmem() for _ in range(N_MOD + 1)],
        out_specs=vmem(),
    )(*flat, params)
    return {'mire': out[:N_BATCH], 'base': out[N_BATCH:]}


# ---- host-side parameter folding: 7x7 conv -> Toeplitz matrices (zero padding baked in) ----
def _build_spatial_toeplitz(w2kk):
    """w2kk: numpy (2, K, K) conv weight (channel 0 -> max map, channel 1 -> avg map).
    Returns (2, HW, HW) T with  conv(map)[p] = sum_q map_flat[q] * T[c, q, p]  (cross-correlation)."""
    T = np.zeros((2, HW, HW), np.float32)
    for i in range(H):
        for j in range(W):
            p = i * W + j
            for ky in range(K):
                ii = i + ky - P
                if not (0 <= ii < H):
                    continue
                for kx in range(K):
                    jj = j + kx - P
                    if not (0 <= jj < W):
                        continue
                    T[:, ii * W + jj, p] = w2kk[:, ky, kx]
    return T


def pack_params(sa1_w, sa1_b, sa2_w, sa2_b, w1, w2):
    """Pack both folded spatial-attention convs (block Toeplitz + bias row), the SE MLP weights and
    a 4x4 identity into ONE lane-dense (256, 98) slab -> a single parameter DMA."""
    t1 = _build_spatial_toeplitz(np.asarray(sa1_w, np.float32)[0])    # [max, avg] taps, vision
    t2 = _build_spatial_toeplitz(np.asarray(sa2_w, np.float32)[0])    # [max, avg] taps, sensor
    pk = np.zeros((P_ROWS, P_COLS), np.float32)
    # Block Toeplitz: LHS row layout [mx_v | av_v | mx_s | av_s]; cols = [vision out | sensor out].
    pk[0 * HW:1 * HW, 0:HW]      = t1[0]
    pk[1 * HW:2 * HW, 0:HW]      = t1[1]
    pk[2 * HW:3 * HW, HW:2 * HW] = t2[0]
    pk[3 * HW:4 * HW, HW:2 * HW] = t2[1]
    pk[ROW_BIAS, 0:HW]      = float(np.asarray(sa1_b)[0])
    pk[ROW_BIAS, HW:2 * HW] = float(np.asarray(sa2_b)[0])
    pk[ROW_W1:ROW_W1 + C_MID, 0:C_TOTAL] = np.asarray(w1, np.float32)
    pk[ROW_EYE:ROW_EYE + 2 * N_BATCH, 0:2 * N_BATCH] = np.eye(2 * N_BATCH, dtype=np.float32)
    pk[ROW_W2:ROW_W2 + C_TOTAL, 0:C_MID] = np.asarray(w2, np.float32)
    return jnp.asarray(pk)


# ---- pure-JAX reference (mirrors the PyTorch forward) ----
def sc3_reference(inputs, sa1_w, sa1_b, sa2_w, sa2_b, w1, w2):
    x = jnp.concatenate(inputs, axis=1)
    xv, xs = x[:, :C_V], x[:, C_V:]

    def spatial_att(z, w, b):
        mx = jnp.max(z, axis=1, keepdims=True)
        av = jnp.mean(z, axis=1, keepdims=True)
        cat = jnp.concatenate([mx, av], axis=1)
        out = lax.conv_general_dilated(
            cat, w, window_strides=(1, 1), padding=[(P, P), (P, P)],
            dimension_numbers=('NCHW', 'OIHW', 'NCHW'), precision=_HI)
        return jax.nn.sigmoid(out + b.reshape(1, 1, 1, 1))

    out_v = xv * spatial_att(xv, sa1_w, sa1_b)
    out_s = xs * spatial_att(xs, sa2_w, sa2_b)
    out1 = jnp.concatenate([out_v, out_s], axis=1)

    def se(v):  # (N, C)
        h = jnp.maximum(jnp.einsum('nc,mc->nm', v, w1, precision=_HI), 0.0)
        return jnp.einsum('nm,cm->nc', h, w2, precision=_HI)

    maxp = jnp.max(out1, axis=(2, 3))
    avgp = jnp.mean(out1, axis=(2, 3))
    ca = jax.nn.sigmoid(se(maxp) + se(avgp))
    out1 = out1 * ca[:, :, None, None] + x
    base = jnp.mean(x, axis=(2, 3))                # AvgPool2d(7,7) on a 7x7 input
    mire = jnp.max(out1, axis=(2, 3)) + base       # AdaptiveMaxPool2d(1) + base
    return {'mire': mire, 'base': base}


if __name__ == "__main__":
    key = jax.random.PRNGKey(0)
    ks = jax.random.split(key, 10)

    # modality inputs: 4 tensors of shape (N, C_IN, H, W)
    inputs = [jax.random.normal(ks[i], (N_BATCH, C_IN, H, W), jnp.float32) for i in range(N_MOD)]

    # deterministic synthetic parameters (shapes taken from the module __init__)
    sa1_w = 0.1 * jax.random.normal(ks[4], (1, 2, K, K), jnp.float32)   # sa_1 conv weight
    sa1_b = 0.1 * jax.random.normal(ks[5], (1,), jnp.float32)           # sa_1 conv bias
    sa2_w = 0.1 * jax.random.normal(ks[6], (1, 2, K, K), jnp.float32)   # sa_2 conv weight
    sa2_b = 0.1 * jax.random.normal(ks[7], (1,), jnp.float32)           # sa_2 conv bias
    w1 = 0.1 * jax.random.normal(ks[8], (C_MID, C_TOTAL), jnp.float32)  # ca.se[0] (1x1, no bias)
    w2 = 0.1 * jax.random.normal(ks[9], (C_TOTAL, C_MID), jnp.float32)  # ca.se[2] (1x1, no bias)

    # fold conv weights / biases / SE weights into one packed parameter slab (host-side precompute)
    params = pack_params(sa1_w, sa1_b, sa2_w, sa2_b, w1, w2)

    out = sc3_block_pallas(inputs, params)
    jax.block_until_ready(out)

    ref = sc3_reference(inputs, sa1_w, sa1_b, sa2_w, sa2_b, w1, w2)
    for name in ('mire', 'base'):
        np.testing.assert_allclose(np.asarray(out[name]), np.asarray(ref[name]),
                                   rtol=1e-2, atol=1e-2)

    print("KERNEL_OK")
</pallas_src>

<mosaic_0001>
module attributes {stable_mosaic.version = 11 : i64} {
  func.func @sc3_kernel(%arg0: memref<2x8x49xf32, #tpu.memory_space<vmem>>, %arg1: memref<2x8x49xf32, #tpu.memory_space<vmem>>, %arg2: memref<2x8x49xf32, #tpu.memory_space<vmem>>, %arg3: memref<2x8x49xf32, #tpu.memory_space<vmem>>, %arg4: memref<256x98xf32, #tpu.memory_space<vmem>>, %arg5: memref<4x32xf32, #tpu.memory_space<vmem>>) attributes {dimension_semantics = [], scalar_prefetch = 0 : i64, scratch_operands = 0 : i64, tpu.core_type = #tpu.core_type<tc>} {
    %c0 = arith.constant 0 : index
    %c0_0 = arith.constant 0 : index
    %0 = vector.load %arg4[%c0, %c0_0] : memref<256x98xf32, #tpu.memory_space<vmem>>, vector<196x98xf32>
    %c200 = arith.constant 200 : index
    %c0_1 = arith.constant 0 : index
    %1 = vector.load %arg4[%c200, %c0_1] : memref<256x98xf32, #tpu.memory_space<vmem>>, vector<1x98xf32>
    %c208 = arith.constant 208 : index
    %c0_2 = arith.constant 0 : index
    %2 = vector.load %arg4[%c208, %c0_2] : memref<256x98xf32, #tpu.memory_space<vmem>>, vector<2x32xf32>
    %c216 = arith.constant 216 : index
    %c0_3 = arith.constant 0 : index
    %3 = vector.load %arg4[%c216, %c0_3] : memref<256x98xf32, #tpu.memory_space<vmem>>, vector<4x4xf32>
    %c224 = arith.constant 224 : index
    %c0_4 = arith.constant 0 : index
    %4 = vector.load %arg4[%c224, %c0_4] : memref<256x98xf32, #tpu.memory_space<vmem>>, vector<32x2xf32>
    %c0_5 = arith.constant 0 : index
    %c0_6 = arith.constant 0 : index
    %c0_7 = arith.constant 0 : index
    %5 = vector.load %arg0[%c0_5, %c0_6, %c0_7] : memref<2x8x49xf32, #tpu.memory_space<vmem>>, vector<1x8x49xf32>
    %6 = vector.shape_cast %5 : vector<1x8x49xf32> to vector<8x49xf32>
    %c0_8 = arith.constant 0 : index
    %c0_9 = arith.constant 0 : index
    %c0_10 = arith.constant 0 : index
    %7 = vector.load %arg1[%c0_8, %c0_9, %c0_10] : memref<2x8x49xf32, #tpu.memory_space<vmem>>, vector<1x8x49xf32>
    %8 = vector.shape_cast %7 : vector<1x8x49xf32> to vector<8x49xf32>
    %c0_11 = arith.constant 0 : index
    %c0_12 = arith.constant 0 : index
    %c0_13 = arith.constant 0 : index
    %9 = vector.load %arg2[%c0_11, %c0_12, %c0_13] : memref<2x8x49xf32, #tpu.memory_space<vmem>>, vector<1x8x49xf32>
    %10 = vector.shape_cast %9 : vector<1x8x49xf32> to vector<8x49xf32>
    %c0_14 = arith.constant 0 : index
    %c0_15 = arith.constant 0 : index
    %c0_16 = arith.constant 0 : index
    %11 = vector.load %arg3[%c0_14, %c0_15, %c0_16] : memref<2x8x49xf32, #tpu.memory_space<vmem>>, vector<1x8x49xf32>
    %12 = vector.shape_cast %11 : vector<1x8x49xf32> to vector<8x49xf32>
    %13 = tpu.concatenate %6, %8, %10, %12 in 0 : vector<8x49xf32>, vector<8x49xf32>, vector<8x49xf32>, vector<8x49xf32> -> vector<32x49xf32>
    %14 = vector.extract_strided_slice %13 {offsets = [0, 0], sizes = [16, 49], strides = [1, 1]} : vector<32x49xf32> to vector<16x49xf32>
    %15 = vector.extract_strided_slice %13 {offsets = [16, 0], sizes = [16, 49], strides = [1, 1]} : vector<32x49xf32> to vector<16x49xf32>
    %cst = arith.constant dense<0xFF800000> : vector<49xf32>
    %16 = vector.multi_reduction <maximumf>, %14, %cst [0] : vector<16x49xf32> to vector<49xf32>
    %17 = vector.shape_cast %16 : vector<49xf32> to vector<1x49xf32>
    %cst_17 = arith.constant dense<0.000000e+00> : vector<49xf32>
    %18 = vector.multi_reduction <add>, %14, %cst_17 [0] : vector<16x49xf32> to vector<49xf32>
    %19 = vector.shape_cast %18 : vector<49xf32> to vector<1x49xf32>
    %cst_18 = arith.constant 6.250000e-02 : f32
    %20 = vector.broadcast %cst_18 : f32 to vector<1x49xf32>
    %21 = arith.mulf %19, %20 : vector<1x49xf32>
    %cst_19 = arith.constant dense<0xFF800000> : vector<49xf32>
    %22 = vector.multi_reduction <maximumf>, %15, %cst_19 [0] : vector<16x49xf32> to vector<49xf32>
    %23 = vector.shape_cast %22 : vector<49xf32> to vector<1x49xf32>
    %cst_20 = arith.constant dense<0.000000e+00> : vector<49xf32>
    %24 = vector.multi_reduction <add>, %15, %cst_20 [0] : vector<16x49xf32> to vector<49xf32>
    %25 = vector.shape_cast %24 : vector<49xf32> to vector<1x49xf32>
    %cst_21 = arith.constant 6.250000e-02 : f32
    %26 = vector.broadcast %cst_21 : f32 to vector<1x49xf32>
    %27 = arith.mulf %25, %26 : vector<1x49xf32>
    %28 = tpu.concatenate %17, %21, %23, %27 in 1 : vector<1x49xf32>, vector<1x49xf32>, vector<1x49xf32>, vector<1x49xf32> -> vector<1x196xf32>
    %c1 = arith.constant 1 : index
    %c0_22 = arith.constant 0 : index
    %c0_23 = arith.constant 0 : index
    %29 = vector.load %arg0[%c1, %c0_22, %c0_23] : memref<2x8x49xf32, #tpu.memory_space<vmem>>, vector<1x8x49xf32>
    %30 = vector.shape_cast %29 : vector<1x8x49xf32> to vector<8x49xf32>
    %c1_24 = arith.constant 1 : index
    %c0_25 = arith.constant 0 : index
    %c0_26 = arith.constant 0 : index
    %31 = vector.load %arg1[%c1_24, %c0_25, %c0_26] : memref<2x8x49xf32, #tpu.memory_space<vmem>>, vector<1x8x49xf32>
    %32 = vector.shape_cast %31 : vector<1x8x49xf32> to vector<8x49xf32>
    %c1_27 = arith.constant 1 : index
    %c0_28 = arith.constant 0 : index
    %c0_29 = arith.constant 0 : index
    %33 = vector.load %arg2[%c1_27, %c0_28, %c0_29] : memref<2x8x49xf32, #tpu.memory_space<vmem>>, vector<1x8x49xf32>
    %34 = vector.shape_cast %33 : vector<1x8x49xf32> to vector<8x49xf32>
    %c1_30 = arith.constant 1 : index
    %c0_31 = arith.constant 0 : index
    %c0_32 = arith.constant 0 : index
    %35 = vector.load %arg3[%c1_30, %c0_31, %c0_32] : memref<2x8x49xf32, #tpu.memory_space<vmem>>, vector<1x8x49xf32>
    %36 = vector.shape_cast %35 : vector<1x8x49xf32> to vector<8x49xf32>
    %37 = tpu.concatenate %30, %32, %34, %36 in 0 : vector<8x49xf32>, vector<8x49xf32>, vector<8x49xf32>, vector<8x49xf32> -> vector<32x49xf32>
    %38 = vector.extract_strided_slice %37 {offsets = [0, 0], sizes = [16, 49], strides = [1, 1]} : vector<32x49xf32> to vector<16x49xf32>
    %39 = vector.extract_strided_slice %37 {offsets = [16, 0], sizes = [16, 49], strides = [1, 1]} : vector<32x49xf32> to vector<16x49xf32>
    %cst_33 = arith.constant dense<0xFF800000> : vector<49xf32>
    %40 = vector.multi_reduction <maximumf>, %38, %cst_33 [0] : vector<16x49xf32> to vector<49xf32>
    %41 = vector.shape_cast %40 : vector<49xf32> to vector<1x49xf32>
    %cst_34 = arith.constant dense<0.000000e+00> : vector<49xf32>
    %42 = vector.multi_reduction <add>, %38, %cst_34 [0] : vector<16x49xf32> to vector<49xf32>
    %43 = vector.shape_cast %42 : vector<49xf32> to vector<1x49xf32>
    %cst_35 = arith.constant 6.250000e-02 : f32
    %44 = vector.broadcast %cst_35 : f32 to vector<1x49xf32>
    %45 = arith.mulf %43, %44 : vector<1x49xf32>
    %cst_36 = arith.constant dense<0xFF800000> : vector<49xf32>
    %46 = vector.multi_reduction <maximumf>, %39, %cst_36 [0] : vector<16x49xf32> to vector<49xf32>
    %47 = vector.shape_cast %46 : vector<49xf32> to vector<1x49xf32>
    %cst_37 = arith.constant dense<0.000000e+00> : vector<49xf32>
    %48 = vector.multi_reduction <add>, %39, %cst_37 [0] : vector<16x49xf32> to vector<49xf32>
    %49 = vector.shape_cast %48 : vector<49xf32> to vector<1x49xf32>
    %cst_38 = arith.constant 6.250000e-02 : f32
    %50 = vector.broadcast %cst_38 : f32 to vector<1x49xf32>
    %51 = arith.mulf %49, %50 : vector<1x49xf32>
    %52 = tpu.concatenate %41, %45, %47, %51 in 1 : vector<1x49xf32>, vector<1x49xf32>, vector<1x49xf32>, vector<1x49xf32> -> vector<1x196xf32>
    %53 = tpu.concatenate %28, %52 in 0 : vector<1x196xf32>, vector<1x196xf32> -> vector<2x196xf32>
    %cst_39 = arith.constant dense<0.000000e+00> : vector<2x98xf32>
    %54 = tpu.matmul %53, %0, %cst_39 {dimension_numbers = #tpu.dot_dimension_numbers<[1], [0], [0], [1], [0, 0, 1, 1], [], []>, precision = #tpu.contract_precision<fp32>} : vector<2x196xf32>, vector<196x98xf32>, vector<2x98xf32> -> vector<2x98xf32>
    %55 = vector.broadcast %1 : vector<1x98xf32> to vector<2x98xf32>
    %56 = arith.addf %54, %55 : vector<2x98xf32>
    %cst_40 = arith.constant 0.000000e+00 : f32
    %57 = vector.broadcast %cst_40 : f32 to vector<2x98xf32>
    %58 = arith.subf %57, %56 : vector<2x98xf32>
    %59 = math.exp %58 : vector<2x98xf32>
    %cst_41 = arith.constant 1.000000e+00 : f32
    %60 = vector.broadcast %cst_41 : f32 to vector<2x98xf32>
    %61 = arith.addf %60, %59 : vector<2x98xf32>
    %62 = tpu.reciprocal %61 : vector<2x98xf32> -> vector<2x98xf32>
    %63 = vector.extract_strided_slice %62 {offsets = [0, 0], sizes = [1, 49], strides = [1, 1]} : vector<2x98xf32> to vector<1x49xf32>
    %64 = vector.extract_strided_slice %62 {offsets = [0, 49], sizes = [1, 49], strides = [1, 1]} : vector<2x98xf32> to vector<1x49xf32>
    %65 = vector.extract_strided_slice %13 {offsets = [0, 0], sizes = [16, 49], strides = [1, 1]} : vector<32x49xf32> to vector<16x49xf32>
    %66 = vector.broadcast %63 : vector<1x49xf32> to vector<16x49xf32>
    %67 = arith.mulf %65, %66 : vector<16x49xf32>
    %68 = vector.extract_strided_slice %13 {offsets = [16, 0], sizes = [16, 49], strides = [1, 1]} : vector<32x49xf32> to vector<16x49xf32>
    %69 = vector.broadcast %64 : vector<1x49xf32> to vector<16x49xf32>
    %70 = arith.mulf %68, %69 : vector<16x49xf32>
    %71 = tpu.concatenate %67, %70 in 0 : vector<16x49xf32>, vector<16x49xf32> -> vector<32x49xf32>
    %cst_42 = arith.constant dense<0xFF800000> : vector<32xf32>
    %72 = vector.multi_reduction <maximumf>, %71, %cst_42 [1] : vector<32x49xf32> to vector<32xf32>
    %73 = vector.shape_cast %72 : vector<32xf32> to vector<32x1xf32>
    %cst_43 = arith.constant dense<0.000000e+00> : vector<32xf32>
    %74 = vector.multi_reduction <add>, %71, %cst_43 [1] : vector<32x49xf32> to vector<32xf32>
    %75 = vector.shape_cast %74 : vector<32xf32> to vector<32x1xf32>
    %cst_44 = arith.constant 0.0204081628 : f32
    %76 = vector.broadcast %cst_44 : f32 to vector<32x1xf32>
    %77 = arith.mulf %75, %76 : vector<32x1xf32>
    %78 = vector.extract_strided_slice %62 {offsets = [1, 0], sizes = [1, 49], strides = [1, 1]} : vector<2x98xf32> to vector<1x49xf32>
    %79 = vector.extract_strided_slice %62 {offsets = [1, 49], sizes = [1, 49], strides = [1, 1]} : vector<2x98xf32> to vector<1x49xf32>
    %80 = vector.extract_strided_slice %37 {offsets = [0, 0], sizes = [16, 49], strides = [1, 1]} : vector<32x49xf32> to vector<16x49xf32>
    %81 = vector.broadcast %78 : vector<1x49xf32> to vector<16x49xf32>
    %82 = arith.mulf %80, %81 : vector<16x49xf32>
    %83 = vector.extract_strided_slice %37 {offsets = [16, 0], sizes = [16, 49], strides = [1, 1]} : vector<32x49xf32> to vector<16x49xf32>
    %84 = vector.broadcast %79 : vector<1x49xf32> to vector<16x49xf32>
    %85 = arith.mulf %83, %84 : vector<16x49xf32>
    %86 = tpu.concatenate %82, %85 in 0 : vector<16x49xf32>, vector<16x49xf32> -> vector<32x49xf32>
    %cst_45 = arith.constant dense<0xFF800000> : vector<32xf32>
    %87 = vector.multi_reduction <maximumf>, %86, %cst_45 [1] : vector<32x49xf32> to vector<32xf32>
    %88 = vector.shape_cast %87 : vector<32xf32> to vector<32x1xf32>
    %cst_46 = arith.constant dense<0.000000e+00> : vector<32xf32>
    %89 = vector.multi_reduction <add>, %86, %cst_46 [1] : vector<32x49xf32> to vector<32xf32>
    %90 = vector.shape_cast %89 : vector<32xf32> to vector<32x1xf32>
    %cst_47 = arith.constant 0.0204081628 : f32
    %91 = vector.broadcast %cst_47 : f32 to vector<32x1xf32>
    %92 = arith.mulf %90, %91 : vector<32x1xf32>
    %93 = tpu.concatenate %73, %88, %77, %92 in 1 : vector<32x1xf32>, vector<32x1xf32>, vector<32x1xf32>, vector<32x1xf32> -> vector<32x4xf32>
    %cst_48 = arith.constant dense<0.000000e+00> : vector<2x4xf32>
    %94 = tpu.matmul %2, %93, %cst_48 {dimension_numbers = #tpu.dot_dimension_numbers<[1], [0], [0], [1], [0, 0, 1, 1], [], []>, precision = #tpu.contract_precision<fp32>} : vector<2x32xf32>, vector<32x4xf32>, vector<2x4xf32> -> vector<2x4xf32>
    %cst_49 = arith.constant 0.000000e+00 : f32
    %95 = vector.broadcast %cst_49 : f32 to vector<2x4xf32>
    %96 = arith.maximumf %94, %95 : vector<2x4xf32>
    %cst_50 = arith.constant dense<0.000000e+00> : vector<32x4xf32>
    %97 = tpu.matmul %4, %96, %cst_50 {dimension_numbers = #tpu.dot_dimension_numbers<[1], [0], [0], [1], [0, 0, 1, 1], [], []>, precision = #tpu.contract_precision<fp32>} : vector<32x2xf32>, vector<2x4xf32>, vector<32x4xf32> -> vector<32x4xf32>
    %98 = vector.extract_strided_slice %97 {offsets = [0, 0], sizes = [32, 2], strides = [1, 1]} : vector<32x4xf32> to vector<32x2xf32>
    %99 = vector.extract_strided_slice %97 {offsets = [0, 2], sizes = [32, 2], strides = [1, 1]} : vector<32x4xf32> to vector<32x2xf32>
    %100 = arith.addf %98, %99 : vector<32x2xf32>
    %cst_51 = arith.constant 0.000000e+00 : f32
    %101 = vector.broadcast %cst_51 : f32 to vector<32x2xf32>
    %102 = arith.subf %101, %100 : vector<32x2xf32>
    %103 = math.exp %102 : vector<32x2xf32>
    %cst_52 = arith.constant 1.000000e+00 : f32
    %104 = vector.broadcast %cst_52 : f32 to vector<32x2xf32>
    %105 = arith.addf %104, %103 : vector<32x2xf32>
    %106 = tpu.reciprocal %105 : vector<32x2xf32> -> vector<32x2xf32>
    %107 = vector.extract_strided_slice %106 {offsets = [0, 0], sizes = [32, 1], strides = [1, 1]} : vector<32x2xf32> to vector<32x1xf32>
    %108 = vector.broadcast %107 : vector<32x1xf32> to vector<32x49xf32>
    %109 = arith.mulf %71, %108 : vector<32x49xf32>
    %110 = arith.addf %109, %13 : vector<32x49xf32>
    %cst_53 = arith.constant dense<0.000000e+00> : vector<32xf32>
    %111 = vector.multi_reduction <add>, %13, %cst_53 [1] : vector<32x49xf32> to vector<32xf32>
    %112 = vector.shape_cast %111 : vector<32xf32> to vector<32x1xf32>
    %cst_54 = arith.constant 0.0204081628 : f32
    %113 = vector.broadcast %cst_54 : f32 to vector<32x1xf32>
    %114 = arith.mulf %112, %113 : vector<32x1xf32>
    %cst_55 = arith.constant dense<0xFF800000> : vector<32xf32>
    %115 = vector.multi_reduction <maximumf>, %110, %cst_55 [1] : vector<32x49xf32> to vector<32xf32>
    %116 = vector.shape_cast %115 : vector<32xf32> to vector<32x1xf32>
    %117 = arith.addf %116, %114 : vector<32x1xf32>
    %118 = vector.extract_strided_slice %106 {offsets = [0, 1], sizes = [32, 1], strides = [1, 1]} : vector<32x2xf32> to vector<32x1xf32>
    %119 = vector.broadcast %118 : vector<32x1xf32> to vector<32x49xf32>
    %120 = arith.mulf %86, %119 : vector<32x49xf32>
    %121 = arith.addf %120, %37 : vector<32x49xf32>
    %cst_56 = arith.constant dense<0.000000e+00> : vector<32xf32>
    %122 = vector.multi_reduction <add>, %37, %cst_56 [1] : vector<32x49xf32> to vector<32xf32>
    %123 = vector.shape_cast %122 : vector<32xf32> to vector<32x1xf32>
    %cst_57 = arith.constant 0.0204081628 : f32
    %124 = vector.broadcast %cst_57 : f32 to vector<32x1xf32>
    %125 = arith.mulf %123, %124 : vector<32x1xf32>
    %cst_58 = arith.constant dense<0xFF800000> : vector<32xf32>
    %126 = vector.multi_reduction <maximumf>, %121, %cst_58 [1] : vector<32x49xf32> to vector<32xf32>
    %127 = vector.shape_cast %126 : vector<32xf32> to vector<32x1xf32>
    %128 = arith.addf %127, %125 : vector<32x1xf32>
    %129 = tpu.concatenate %117, %128, %114, %125 in 1 : vector<32x1xf32>, vector<32x1xf32>, vector<32x1xf32>, vector<32x1xf32> -> vector<32x4xf32>
    %cst_59 = arith.constant dense<0.000000e+00> : vector<4x32xf32>
    %130 = tpu.matmul %3, %129, %cst_59 {dimension_numbers = #tpu.dot_dimension_numbers<[1], [1], [0], [0], [0, 0, 1, 0], [], []>, precision = #tpu.contract_precision<fp32>} : vector<4x4xf32>, vector<32x4xf32>, vector<4x32xf32> -> vector<4x32xf32>
    %c0_60 = arith.constant 0 : index
    %c0_61 = arith.constant 0 : index
    %131 = vector.load %arg5[%c0_60, %c0_61] : memref<4x32xf32, #tpu.memory_space<vmem>>, vector<4x32xf32>
    tpu.vector_store %arg5[%c0_60, %c0_61], %130 {strides = array<i32>} : memref<4x32xf32, #tpu.memory_space<vmem>>, vector<4x32xf32>,
    return
  }
}

</mosaic_0001>

<llo_original>
// kernel: sc3_block_pallas.1
$region0: #{sc3_block_pallas.1}
  #allocation0 [shape = 'u32[]', space=smem, size = 0x4, offset = 0x4, fixed_abs, tag = 'smem constant byte address 0x4 - core index']
  #allocation1 [shape = 'u32[144,128]{1,0:T(1,128)}', space=vmem, size = 0x12000, scoped, tag = 'internal scratch']
  %s0 = inlined_call_operand.vmem [shape: f32[2,8,49], index: 0, kind: input, shape index: {}]
  %s1 = inlined_call_operand.vmem [shape: f32[2,8,49], index: 1, kind: input, shape index: {}]
  %s2 = inlined_call_operand.vmem [shape: f32[2,8,49], index: 2, kind: input, shape index: {}]
  %s3 = inlined_call_operand.vmem [shape: f32[2,8,49], index: 3, kind: input, shape index: {}]
  %s4 = inlined_call_operand.vmem [shape: f32[256,98], index: 4, kind: input, shape index: {}]
  %s5 = inlined_call_operand.vmem [shape: f32[4,32], index: 5, kind: output, shape index: {}]
  %s6 = sld [smem:[#allocation0]]
  $region30: #{sc3_block_pallas.1} parent=0
    _
  %s8 = ssub.s32 1, %s6
  %s9 = scalar_select 0, %s8, %s6
  // Predicated region
  $region2: #{sc3_block_pallas.1} parent=0 // pred_check
    _
  $region3: #{sc3_block_pallas.1} parent=0 // pred_check_branch
    %11 = sbr.rel (0) target = $region5
  $region4: #{sc3_block_pallas.1} parent=0 // pred_region
    _
  $region5: #{sc3_block_pallas.1} parent=0 // pred_fallthru
    _
  // Predicated region
  $region6: #{sc3_block_pallas.1} parent=0 // pred_check
    _
  $region7: #{sc3_block_pallas.1} parent=0 // pred_check_branch
    %13 = sbr.rel (0) target = $region9
  $region8: #{sc3_block_pallas.1} parent=0 // pred_region
    _
  $region9: #{sc3_block_pallas.1} parent=0 // pred_fallthru
    _
  // Predicated region
  $region10: #{sc3_block_pallas.1} parent=0 // pred_check
    _
  $region11: #{sc3_block_pallas.1} parent=0 // pred_check_branch
    %15 = sbr.rel (0) target = $region13
  $region12: #{sc3_block_pallas.1} parent=0 // pred_region
    _
  $region13: #{sc3_block_pallas.1} parent=0 // pred_fallthru
    _
  // Predicated region
  $region14: #{sc3_block_pallas.1} parent=0 // pred_check
    _
  $region15: #{sc3_block_pallas.1} parent=0 // pred_check_branch
    %17 = sbr.rel (0) target = $region17
  $region16: #{sc3_block_pallas.1} parent=0 // pred_region
    _
  $region17: #{sc3_block_pallas.1} parent=0 // pred_fallthru
    _
  // Predicated region
  $region18: #{sc3_block_pallas.1} parent=0 // pred_check
    _
  $region19: #{sc3_block_pallas.1} parent=0 // pred_check_branch
    %19 = sbr.rel (0) target = $region21
  $region20: #{sc3_block_pallas.1} parent=0 // pred_region
    _
  $region21: #{sc3_block_pallas.1} parent=0 // pred_fallthru
    _
  %v20 = vld [vmem:[%s4] sm:$0xff]
  %v21 = vld [vmem:[%s4 + $0x8] sm:$0xff]
  %v22 = vld [vmem:[%s4 + $0x10] sm:$0xff]
  %v23 = vld [vmem:[%s4 + $0x18] sm:$0xff]
  %v24 = vld [vmem:[%s4 + $0x20] sm:$0xff]
  %v25 = vld [vmem:[%s4 + $0x28] sm:$0xff]
  %v26 = vld [vmem:[%s4 + $0x30] sm:$0xff]
  %v27 = vld [vmem:[%s4 + $0x38] sm:$0xff]
  %v28 = vld [vmem:[%s4 + $0x40] sm:$0xff]
  %v29 = vld [vmem:[%s4 + $0x48] sm:$0xff]
  %v30 = vld [vmem:[%s4 + $0x50] sm:$0xff]
  %v31 = vld [vmem:[%s4 + $0x58] sm:$0xff]
  %v32 = vld [vmem:[%s4 + $0x60] sm:$0xff]
  %v33 = vld [vmem:[%s4 + $0x68] sm:$0xff]
  %v34 = vld [vmem:[%s4 + $0x70] sm:$0xff]
  %v35 = vld [vmem:[%s4 + $0x78] sm:$0xff]
  %v36 = vld [vmem:[%s4 + $0x80] sm:$0xff]
  %v37 = vld [vmem:[%s4 + $0x88] sm:$0xff]
  %v38 = vld [vmem:[%s4 + $0x90] sm:$0xff]
  %v39 = vld [vmem:[%s4 + $0x98] sm:$0xff]
  %v40 = vld [vmem:[%s4 + $0xa0] sm:$0xff]
  %v41 = vld [vmem:[%s4 + $0xa8] sm:$0xff]
  %v42 = vld [vmem:[%s4 + $0xb0] sm:$0xff]
  %v43 = vld [vmem:[%s4 + $0xb8] sm:$0xff]
  %v44 = vld [vmem:[%s4 + $0xc0] sm:$0xf]
  %v45 = vld [vmem:[%s4 + $0xc8] sm:$0x1]
  %v46 = vld [vmem:[%s4 + $0xd0] sm:$0x3]
  %v47 = vld [vmem:[%s4 + $0xd8] sm:$0xf]
  %v48 = vld [vmem:[%s4 + $0xe0] sm:$0xff]
  %v49 = vld [vmem:[%s4 + $0xe8] sm:$0xff]
  %v50 = vld [vmem:[%s4 + $0xf0] sm:$0xff]
  %v51 = vld [vmem:[%s4 + $0xf8] sm:$0xff]
  %v52 = vld [vmem:[%s0] sm:$0xff]
  %v53 = vld [vmem:[%s1] sm:$0xff]
  %v54 = vld [vmem:[%s2] sm:$0xff]
  %v55 = vld [vmem:[%s3] sm:$0xff]
  %vm56 = vcmask 400384
  %v57 = vsel %vm56, %v52, -inf
  %v58 = vsel %vm56, %v53, -inf
  %v59 = vmax.f32 %v57, %v58
  %v60 = vrot.slane %v59, 4
  %v61 = vmax.f32 %v59, %v60
  %v62 = vrot.slane %v61, 2
  %v63 = vmax.f32 %v61, %v62
  %v64 = vrot.slane %v63, 1
  %v65 = vmax.f32 %v63, %v64
  %v66 = vsel %vm56, %v52, 0.0
  %v67 = vsel %vm56, %v53, 0.0
  %v68 = vadd.f32 %v66, %v67
  %v69 = vrot.slane %v68, 4
  %v70 = vadd.f32 %v68, %v69
  %v71 = vrot.slane %v70, 2
  %v72 = vadd.f32 %v70, %v71
  %v73 = vrot.slane %v72, 1
  %v74 = vadd.f32 %v72, %v73
  %v75 = vmul.f32 %v74, 0.0625
  %v76 = vsel %vm56, %v54, -inf
  %v77 = vsel %vm56, %v55, -inf
  %v78 = vmax.f32 %v76, %v77
  %v79 = vrot.slane %v78, 4
  %v80 = vmax.f32 %v78, %v79
  %v81 = vrot.slane %v80, 2
  %v82 = vmax.f32 %v80, %v81
  %v83 = vrot.slane %v82, 1
  %v84 = vmax.f32 %v82, %v83
  %v85 = vsel %vm56, %v54, 0.0
  %v86 = vsel %vm56, %v55, 0.0
  %v87 = vadd.f32 %v85, %v86
  %v88 = vrot.slane %v87, 4
  %v89 = vadd.f32 %v87, %v88
  %v90 = vrot.slane %v89, 2
  %v91 = vadd.f32 %v89, %v90
  %v92 = vrot.slane %v91, 1
  %v93 = vadd.f32 %v91, %v92
  %v94 = vmul.f32 %v93, 0.0625
  %96 = vrot.lane.b32.xlu0 %v75, 49
  %v97 = vpop.permute.xlu0 %96
  %100 = vrot.lane.b32.xlu0 %v84, 98
  %v101 = vpop.permute.xlu0 %100
  %104 = vrot.lane.b32.xlu0 %v94, 19
  %v105 = vpop.permute.xlu0 %104
  %v107 = vsel %vm56, %v65, %v97
  %vm108 = vcmask 801792
  %v109 = vsel %vm108, %v107, %v101
  %vm110 = vcmask 154624
  %v111 = vsel %vm110, %v101, %v105
  %s112 = scalar_lea.vmem %s0, 8
  %v113 = vld [vmem:[%s112] sm:$0xff]
  %s114 = scalar_lea.vmem %s1, 8
  %v115 = vld [vmem:[%s114] sm:$0xff]
  %s116 = scalar_lea.vmem %s2, 8
  %v117 = vld [vmem:[%s116] sm:$0xff]
  %s118 = scalar_lea.vmem %s3, 8
  %v119 = vld [vmem:[%s118] sm:$0xff]
  %v120 = vsel %vm56, %v113, -inf
  %v121 = vsel %vm56, %v115, -inf
  %v122 = vmax.f32 %v120, %v121
  %v123 = vrot.slane %v122, 4
  %v124 = vmax.f32 %v122, %v123
  %v125 = vrot.slane %v124, 2
  %v126 = vmax.f32 %v124, %v125
  %v127 = vrot.slane %v126, 1
  %v128 = vmax.f32 %v126, %v127
  %v129 = vsel %vm56, %v113, 0.0
  %v130 = vsel %vm56, %v115, 0.0
  %v131 = vadd.f32 %v129, %v130
  %v132 = vrot.slane %v131, 4
  %v133 = vadd.f32 %v131, %v132
  %v134 = vrot.slane %v133, 2
  %v135 = vadd.f32 %v133, %v134
  %v136 = vrot.slane %v135, 1
  %v137 = vadd.f32 %v135, %v136
  %v138 = vmul.f32 %v137, 0.0625
  %v139 = vsel %vm56, %v117, -inf
  %v140 = vsel %vm56, %v119, -inf
  %v141 = vmax.f32 %v139, %v140
  %v142 = vrot.slane %v141, 4
  %v143 = vmax.f32 %v141, %v142
  %v144 = vrot.slane %v143, 2
  %v145 = vmax.f32 %v143, %v144
  %v146 = vrot.slane %v145, 1
  %v147 = vmax.f32 %v145, %v146
  %v148 = vsel %vm56, %v117, 0.0
  %v149 = vsel %vm56, %v119, 0.0
  %v150 = vadd.f32 %v148, %v149
  %v151 = vrot.slane %v150, 4
  %v152 = vadd.f32 %v150, %v151
  %v153 = vrot.slane %v152, 2
  %v154 = vadd.f32 %v152, %v153
  %v155 = vrot.slane %v154, 1
  %v156 = vadd.f32 %v154, %v155
  %v157 = vmul.f32 %v156, 0.0625
  %159 = vrot.lane.b32.xlu0 %v138, 49
  %v160 = vpop.permute.xlu0 %159
  %163 = vrot.lane.b32.xlu0 %v147, 98
  %v164 = vpop.permute.xlu0 %163
  %167 = vrot.lane.b32.xlu0 %v157, 19
  %v168 = vpop.permute.xlu0 %167
  %v170 = vsel %vm56, %v128, %v160
  %v171 = vsel %vm108, %v170, %v164
  %v172 = vsel %vm110, %v164, %v168
  %v175 = vrot.slane %v171, 7
  %v176 = vrot.slane %v172, 7
  %vm179 = vcmask 1040384
  %v180 = vsel %vm179, %v109, %v175
  %v181 = vsel %vm179, %v111, %v176
  %v182 = vlaneseq
  %v183 = vshrl.u32 %v182, 7
  %v184 = vsub.s32 0, %v183
  %v185 = vrot.slane %v45, %v184
  %vm186 = vcmask 556032
  %v188 = vsel %vm186, %v181, 0
  %vm190 = vcmask 1043456
  %v192 = vsel %vm190, %v44, 0
  %194 = vmatprep.subr.mxu0 0.0
  %v195 = vand.u32 %v20, 4294901760
  %196 = vmatpush1.msra.mxu0 %v195
  %197 = vmatprep.subr.mxu0 0.0
  %v198 = vand.u32 %v21, 4294901760
  %199 = vmatpush1.msra.mxu0 %v198
  %200 = vmatprep.subr.mxu0 0.0
  %v201 = vand.u32 %v22, 4294901760
  %202 = vmatpush1.msra.mxu0 %v201
  %203 = vmatprep.subr.mxu0 0.0
  %v204 = vand.u32 %v23, 4294901760
  %205 = vmatpush1.msra.mxu0 %v204
  %206 = vmatprep.subr.mxu0 0.0
  %v207 = vand.u32 %v24, 4294901760
  %208 = vmatpush1.msra.mxu0 %v207
  %209 = vmatprep.subr.mxu0 0.0
  %v210 = vand.u32 %v25, 4294901760
  %211 = vmatpush1.msra.mxu0 %v210
  %212 = vmatprep.subr.mxu0 0.0
  %v213 = vand.u32 %v26, 4294901760
  %214 = vmatpush1.msra.mxu0 %v213
  %215 = vmatprep.subr.mxu0 0.0
  %v216 = vand.u32 %v27, 4294901760
  %217 = vmatpush1.msra.mxu0 %v216
  %218 = vmatprep.subr.mxu0 0.0
  %v219 = vand.u32 %v28, 4294901760
  %220 = vmatpush1.msra.mxu0 %v219
  %221 = vmatprep.subr.mxu0 0.0
  %v222 = vand.u32 %v29, 4294901760
  %223 = vmatpush1.msra.mxu0 %v222
  %224 = vmatprep.subr.mxu0 0.0
  %v225 = vand.u32 %v30, 4294901760
  %226 = vmatpush1.msra.mxu0 %v225
  %227 = vmatprep.subr.mxu0 0.0
  %v228 = vand.u32 %v31, 4294901760
  %229 = vmatpush1.msra.mxu0 %v228
  %230 = vmatprep.subr.mxu0 0.0
  %v231 = vand.u32 %v32, 4294901760
  %232 = vmatpush1.msra.mxu0 %v231
  %233 = vmatprep.subr.mxu0 0.0
  %v234 = vand.u32 %v33, 4294901760
  %235 = vmatpush1.msra.mxu0 %v234
  %236 = vmatprep.subr.mxu0 0.0
  %v237 = vand.u32 %v34, 4294901760
  %238 = vmatpush1.msra.mxu0 %v237
  %239 = vmatprep.subr.mxu0 0.0
  %v240 = vand.u32 %v35, 4294901760
  %241 = vmatpush1.msra.mxu0 %v240
  %242 = vmatprep.subr.mxu0 0.0
  %v243 = vand.u32 %v36, 4294901760
  %244 = vmatpush1.msra.mxu0 %v243
  %245 = vmatprep.subr.mxu0 0.0
  %v246 = vand.u32 %v37, 4294901760
  %247 = vmatpush1.msra.mxu0 %v246
  %248 = vmatprep.subr.mxu0 0.0
  %v249 = vand.u32 %v38, 4294901760
  %250 = vmatpush1.msra.mxu0 %v249
  %251 = vmatprep.subr.mxu0 0.0
  %v252 = vand.u32 %v39, 4294901760
  %253 = vmatpush1.msra.mxu0 %v252
  %254 = vmatprep.subr.mxu0 0.0
  %v255 = vand.u32 %v40, 4294901760
  %256 = vmatpush1.msra.mxu0 %v255
  %257 = vmatprep.subr.mxu0 0.0
  %v258 = vand.u32 %v41, 4294901760
  %259 = vmatpush1.msra.mxu0 %v258
  %260 = vmatprep.subr.mxu0 0.0
  %v261 = vand.u32 %v42, 4294901760
  %262 = vmatpush1.msra.mxu0 %v261
  %263 = vmatprep.subr.mxu0 0.0
  %v264 = vand.u32 %v43, 4294901760
  %265 = vmatpush1.msra.mxu0 %v264
  %266 = vmatprep.subr.mxu0 0.0
  %v267 = vand.u32 %v192, 4294901760
  %268 = vmatpush1.msra.mxu0 %v267
  %269 = vmatprep.subr.mxu0 0.0
  %270 = vmatpush1.msra.mxu0 0.0
  %271 = vmatprep.subr.mxu0 0.0
  %272 = vmatpush1.msra.mxu0 0.0
  %273 = vmatprep.subr.mxu0 0.0
  %274 = vmatpush1.msra.mxu0 0.0
  %275 = vmatprep.subr.mxu0 0.0
  %276 = vmatpush1.msra.mxu0 0.0
  %277 = vmatprep.subr.mxu0 0.0
  %278 = vmatpush1.msra.mxu0 0.0
  %279 = vmatprep.subr.mxu0 0.0
  %280 = vmatpush1.msra.mxu0 0.0
  %281 = vmatprep.subr.mxu0 0.0
  %282 = vmatpush1.msra.mxu0 0.0
  %v283 = vand.u32 %v188, 4294901760
  %v284 = vsub.f32 %v188, %v283
  %v285 = vand.u32 %v284, 4294901760
  %v286 = vsub.f32 %v284, %v285
  %v287 = vand.u32 %v286, 4294901760
  %288 = vmatprep.mubr.f32.mxu0 %v287
  %v289 = vand.u32 %v180, 4294901760
  %v290 = vsub.f32 %v180, %v289
  %v291 = vand.u32 %v290, 4294901760
  %v292 = vsub.f32 %v290, %v291
  %v293 = vand.u32 %v292, 4294901760
  %294 = vmatmul.mubr.f32.gmra.mrb[0].mxu0 %v293
  %v295 = vpop.f32.mrb[0].mxu0
  %v296 = vadd.f32 %v185, %v295
  %v297 = vpop.f32.mrb[0].mxu0
  %298 = vdwg.mxu0
  %299 = vmatprep.subr.mxu0 0.0
  %v300 = vand.u32 %v20, 4294901760
  %v301 = vsub.f32 %v20, %v300
  %v302 = vand.u32 %v301, 4294901760
  %v303 = vsub.f32 %v301, %v302
  %v304 = vand.u32 %v303, 4294901760
  %305 = vmatpush1.msra.mxu0 %v304
  %306 = vmatprep.subr.mxu0 0.0
  %v307 = vand.u32 %v21, 4294901760
  %v308 = vsub.f32 %v21, %v307
  %v309 = vand.u32 %v308, 4294901760
  %v310 = vsub.f32 %v308, %v309
  %v311 = vand.u32 %v310, 4294901760
  %312 = vmatpush1.msra.mxu0 %v311
  %313 = vmatprep.subr.mxu0 0.0
  %v314 = vand.u32 %v22, 4294901760
  %v315 = vsub.f32 %v22, %v314
  %v316 = vand.u32 %v315, 4294901760
  %v317 = vsub.f32 %v315, %v316
  %v318 = vand.u32 %v317, 4294901760
  %319 = vmatpush1.msra.mxu0 %v318
  %320 = vmatprep.subr.mxu0 0.0
  %v321 = vand.u32 %v23, 4294901760
  %v322 = vsub.f32 %v23, %v321
  %v323 = vand.u32 %v322, 4294901760
  %v324 = vsub.f32 %v322, %v323
  %v325 = vand.u32 %v324, 4294901760
  %326 = vmatpush1.msra.mxu0 %v325
  %327 = vmatprep.subr.mxu0 0.0
  %v328 = vand.u32 %v24, 4294901760
  %v329 = vsub.f32 %v24, %v328
  %v330 = vand.u32 %v329, 4294901760
  %v331 = vsub.f32 %v329, %v330
  %v332 = vand.u32 %v331, 4294901760
  %333 = vmatpush1.msra.mxu0 %v332
  %334 = vmatprep.subr.mxu0 0.0
  %v335 = vand.u32 %v25, 4294901760
  %v336 = vsub.f32 %v25, %v335
  %v337 = vand.u32 %v336, 4294901760
  %v338 = vsub.f32 %v336, %v337
  %v339 = vand.u32 %v338, 4294901760
  %340 = vmatpush1.msra.mxu0 %v339
  %341 = vmatprep.subr.mxu0 0.0
  %v342 = vand.u32 %v26, 4294901760
  %v343 = vsub.f32 %v26, %v342
  %v344 = vand.u32 %v343, 4294901760
  %v345 = vsub.f32 %v343, %v344
  %v346 = vand.u32 %v345, 4294901760
  %347 = vmatpush1.msra.mxu0 %v346
  %348 = vmatprep.subr.mxu0 0.0
  %v349 = vand.u32 %v27, 4294901760
  %v350 = vsub.f32 %v27, %v349
  %v351 = vand.u32 %v350, 4294901760
  %v352 = vsub.f32 %v350, %v351
  %v353 = vand.u32 %v352, 4294901760
  %354 = vmatpush1.msra.mxu0 %v353
  %355 = vmatprep.subr.mxu0 0.0
  %v356 = vand.u32 %v28, 4294901760
  %v357 = vsub.f32 %v28, %v356
  %v358 = vand.u32 %v357, 4294901760
  %v359 = vsub.f32 %v357, %v358
  %v360 = vand.u32 %v359, 4294901760
  %361 = vmatpush1.msra.mxu0 %v360
  %362 = vmatprep.subr.mxu0 0.0
  %v363 = vand.u32 %v29, 4294901760
  %v364 = vsub.f32 %v29, %v363
  %v365 = vand.u32 %v364, 4294901760
  %v366 = vsub.f32 %v364, %v365
  %v367 = vand.u32 %v366, 4294901760
  %368 = vmatpush1.msra.mxu0 %v367
  %369 = vmatprep.subr.mxu0 0.0
  %v370 = vand.u32 %v30, 4294901760
  %v371 = vsub.f32 %v30, %v370
  %v372 = vand.u32 %v371, 4294901760
  %v373 = vsub.f32 %v371, %v372
  %v374 = vand.u32 %v373, 4294901760
  %375 = vmatpush1.msra.mxu0 %v374
  %376 = vmatprep.subr.mxu0 0.0
  %v377 = vand.u32 %v31, 4294901760
  %v378 = vsub.f32 %v31, %v377
  %v379 = vand.u32 %v378, 4294901760
  %v380 = vsub.f32 %v378, %v379
  %v381 = vand.u32 %v380, 4294901760
  %382 = vmatpush1.msra.mxu0 %v381
  %383 = vmatprep.subr.mxu0 0.0
  %v384 = vand.u32 %v32, 4294901760
  %v385 = vsub.f32 %v32, %v384
  %v386 = vand.u32 %v385, 4294901760
  %v387 = vsub.f32 %v385, %v386
  %v388 = vand.u32 %v387, 4294901760
  %389 = vmatpush1.msra.mxu0 %v388
  %390 = vmatprep.subr.mxu0 0.0
  %v391 = vand.u32 %v33, 4294901760
  %v392 = vsub.f32 %v33, %v391
  %v393 = vand.u32 %v392, 4294901760
  %v394 = vsub.f32 %v392, %v393
  %v395 = vand.u32 %v394, 4294901760
  %396 = vmatpush1.msra.mxu0 %v395
  %397 = vmatprep.subr.mxu0 0.0
  %v398 = vand.u32 %v34, 4294901760
  %v399 = vsub.f32 %v34, %v398
  %v400 = vand.u32 %v399, 4294901760
  %v401 = vsub.f32 %v399, %v400
  %v402 = vand.u32 %v401, 4294901760
  %403 = vmatpush1.msra.mxu0 %v402
  %404 = vmatprep.subr.mxu0 0.0
  %v405 = vand.u32 %v35, 4294901760
  %v406 = vsub.f32 %v35, %v405
  %v407 = vand.u32 %v406, 4294901760
  %v408 = vsub.f32 %v406, %v407
  %v409 = vand.u32 %v408, 4294901760
  %410 = vmatpush1.msra.mxu0 %v409
  %411 = vmatprep.subr.mxu0 0.0
  %v412 = vand.u32 %v36, 4294901760
  %v413 = vsub.f32 %v36, %v412
  %v414 = vand.u32 %v413, 4294901760
  %v415 = vsub.f32 %v413, %v414
  %v416 = vand.u32 %v415, 4294901760
  %417 = vmatpush1.msra.mxu0 %v416
  %418 = vmatprep.subr.mxu0 0.0
  %v419 = vand.u32 %v37, 4294901760
  %v420 = vsub.f32 %v37, %v419
  %v421 = vand.u32 %v420, 4294901760
  %v422 = vsub.f32 %v420, %v421
  %v423 = vand.u32 %v422, 4294901760
  %424 = vmatpush1.msra.mxu0 %v423
  %425 = vmatprep.subr.mxu0 0.0
  %v426 = vand.u32 %v38, 4294901760
  %v427 = vsub.f32 %v38, %v426
  %v428 = vand.u32 %v427, 4294901760
  %v429 = vsub.f32 %v427, %v428
  %v430 = vand.u32 %v429, 4294901760
  %431 = vmatpush1.msra.mxu0 %v430
  %432 = vmatprep.subr.mxu0 0.0
  %v433 = vand.u32 %v39, 4294901760
  %v434 = vsub.f32 %v39, %v433
  %v435 = vand.u32 %v434, 4294901760
  %v436 = vsub.f32 %v434, %v435
  %v437 = vand.u32 %v436, 4294901760
  %438 = vmatpush1.msra.mxu0 %v437
  %439 = vmatprep.subr.mxu0 0.0
  %v440 = vand.u32 %v40, 4294901760
  %v441 = vsub.f32 %v40, %v440
  %v442 = vand.u32 %v441, 4294901760
  %v443 = vsub.f32 %v441, %v442
  %v444 = vand.u32 %v443, 4294901760
  %445 = vmatpush1.msra.mxu0 %v444
  %446 = vmatprep.subr.mxu0 0.0
  %v447 = vand.u32 %v41, 4294901760
  %v448 = vsub.f32 %v41, %v447
  %v449 = vand.u32 %v448, 4294901760
  %v450 = vsub.f32 %v448, %v449
  %v451 = vand.u32 %v450, 4294901760
  %452 = vmatpush1.msra.mxu0 %v451
  %453 = vmatprep.subr.mxu0 0.0
  %v454 = vand.u32 %v42, 4294901760
  %v455 = vsub.f32 %v42, %v454
  %v456 = vand.u32 %v455, 4294901760
  %v457 = vsub.f32 %v455, %v456
  %v458 = vand.u32 %v457, 4294901760
  %459 = vmatpush1.msra.mxu0 %v458
  %460 = vmatprep.subr.mxu0 0.0
  %v461 = vand.u32 %v43, 4294901760
  %v462 = vsub.f32 %v43, %v461
  %v463 = vand.u32 %v462, 4294901760
  %v464 = vsub.f32 %v462, %v463
  %v465 = vand.u32 %v464, 4294901760
  %466 = vmatpush1.msra.mxu0 %v465
  %467 = vmatprep.subr.mxu0 0.0
  %v468 = vand.u32 %v192, 4294901760
  %v469 = vsub.f32 %v192, %v468
  %v470 = vand.u32 %v469, 4294901760
  %v471 = vsub.f32 %v469, %v470
  %v472 = vand.u32 %v471, 4294901760
  %473 = vmatpush1.msra.mxu0 %v472
  %474 = vmatprep.subr.mxu0 0.0
  %475 = vmatpush1.msra.mxu0 0.0
  %476 = vmatprep.subr.mxu0 0.0
  %477 = vmatpush1.msra.mxu0 0.0
  %478 = vmatprep.subr.mxu0 0.0
  %479 = vmatpush1.msra.mxu0 0.0
  %480 = vmatprep.subr.mxu0 0.0
  %481 = vmatpush1.msra.mxu0 0.0
  %482 = vmatprep.subr.mxu0 0.0
  %483 = vmatpush1.msra.mxu0 0.0
  %484 = vmatprep.subr.mxu0 0.0
  %485 = vmatpush1.msra.mxu0 0.0
  %486 = vmatprep.subr.mxu0 0.0
  %487 = vmatpush1.msra.mxu0 0.0
  %v488 = vand.u32 %v188, 4294901760
  %489 = vmatprep.mubr.f32.mxu0 %v488
  %v490 = vand.u32 %v180, 4294901760
  %491 = vmatmul.mubr.f32.gmra.mrb[0].mxu0 %v490
  %v492 = vpop.f32.mrb[0].mxu0
  %v493 = vadd.f32 %v296, %v492
  %v494 = vpop.f32.mrb[0].mxu0
  %495 = vdwg.mxu0
  %496 = vmatprep.subr.mxu0 0.0
  %v497 = vand.u32 %v20, 4294901760
  %v498 = vsub.f32 %v20, %v497
  %499 = vmatpush1.msra.mxu0 %v498
  %500 = vmatprep.subr.mxu0 0.0
  %v501 = vand.u32 %v21, 4294901760
  %v502 = vsub.f32 %v21, %v501
  %503 = vmatpush1.msra.mxu0 %v502
  %504 = vmatprep.subr.mxu0 0.0
  %v505 = vand.u32 %v22, 4294901760
  %v506 = vsub.f32 %v22, %v505
  %507 = vmatpush1.msra.mxu0 %v506
  %508 = vmatprep.subr.mxu0 0.0
  %v509 = vand.u32 %v23, 4294901760
  %v510 = vsub.f32 %v23, %v509
  %511 = vmatpush1.msra.mxu0 %v510
  %512 = vmatprep.subr.mxu0 0.0
  %v513 = vand.u32 %v24, 4294901760
  %v514 = vsub.f32 %v24, %v513
  %515 = vmatpush1.msra.mxu0 %v514
  %516 = vmatprep.subr.mxu0 0.0
  %v517 = vand.u32 %v25, 4294901760
  %v518 = vsub.f32 %v25, %v517
  %519 = vmatpush1.msra.mxu0 %v518
  %520 = vmatprep.subr.mxu0 0.0
  %v521 = vand.u32 %v26, 4294901760
  %v522 = vsub.f32 %v26, %v521
  %523 = vmatpush1.msra.mxu0 %v522
  %524 = vmatprep.subr.mxu0 0.0
  %v525 = vand.u32 %v27, 4294901760
  %v526 = vsub.f32 %v27, %v525
  %527 = vmatpush1.msra.mxu0 %v526
  %528 = vmatprep.subr.mxu0 0.0
  %v529 = vand.u32 %v28, 4294901760
  %v530 = vsub.f32 %v28, %v529
  %531 = vmatpush1.msra.mxu0 %v530
  %532 = vmatprep.subr.mxu0 0.0
  %v533 = vand.u32 %v29, 4294901760
  %v534 = vsub.f32 %v29, %v533
  %535 = vmatpush1.msra.mxu0 %v534
  %536 = vmatprep.subr.mxu0 0.0
  %v537 = vand.u32 %v30, 4294901760
  %v538 = vsub.f32 %v30, %v537
  %539 = vmatpush1.msra.mxu0 %v538
  %540 = vmatprep.subr.mxu0 0.0
  %v541 = vand.u32 %v31, 4294901760
  %v542 = vsub.f32 %v31, %v541
  %543 = vmatpush1.msra.mxu0 %v542
  %544 = vmatprep.subr.mxu0 0.0
  %v545 = vand.u32 %v32, 4294901760
  %v546 = vsub.f32 %v32, %v545
  %547 = vmatpush1.msra.mxu0 %v546
  %548 = vmatprep.subr.mxu0 0.0
  %v549 = vand.u32 %v33, 4294901760
  %v550 = vsub.f32 %v33, %v549
  %551 = vmatpush1.msra.mxu0 %v550
  %552 = vmatprep.subr.mxu0 0.0
  %v553 = vand.u32 %v34, 4294901760
  %v554 = vsub.f32 %v34, %v553
  %555 = vmatpush1.msra.mxu0 %v554
  %556 = vmatprep.subr.mxu0 0.0
  %v557 = vand.u32 %v35, 4294901760
  %v558 = vsub.f32 %v35, %v557
  %559 = vmatpush1.msra.mxu0 %v558
  %560 = vmatprep.subr.mxu0 0.0
  %v561 = vand.u32 %v36, 4294901760
  %v562 = vsub.f32 %v36, %v561
  %563 = vmatpush1.msra.mxu0 %v562
  %564 = vmatprep.subr.mxu0 0.0
  %v565 = vand.u32 %v37, 4294901760
  %v566 = vsub.f32 %v37, %v565
  %567 = vmatpush1.msra.mxu0 %v566
  %568 = vmatprep.subr.mxu0 0.0
  %v569 = vand.u32 %v38, 4294901760
  %v570 = vsub.f32 %v38, %v569
  %571 = vmatpush1.msra.mxu0 %v570
  %572 = vmatprep.subr.mxu0 0.0
  %v573 = vand.u32 %v39, 4294901760
  %v574 = vsub.f32 %v39, %v573
  %575 = vmatpush1.msra.mxu0 %v574
  %576 = vmatprep.subr.mxu0 0.0
  %v577 = vand.u32 %v40, 4294901760
  %v578 = vsub.f32 %v40, %v577
  %579 = vmatpush1.msra.mxu0 %v578
  %580 = vmatprep.subr.mxu0 0.0
  %v581 = vand.u32 %v41, 4294901760
  %v582 = vsub.f32 %v41, %v581
  %583 = vmatpush1.msra.mxu0 %v582
  %584 = vmatprep.subr.mxu0 0.0
  %v585 = vand.u32 %v42, 4294901760
  %v586 = vsub.f32 %v42, %v585
  %587 = vmatpush1.msra.mxu0 %v586
  %588 = vmatprep.subr.mxu0 0.0
  %v589 = vand.u32 %v43, 4294901760
  %v590 = vsub.f32 %v43, %v589
  %591 = vmatpush1.msra.mxu0 %v590
  %592 = vmatprep.subr.mxu0 0.0
  %v593 = vand.u32 %v192, 4294901760
  %v594 = vsub.f32 %v192, %v593
  %595 = vmatpush1.msra.mxu0 %v594
  %596 = vmatprep.subr.mxu0 0.0
  %597 = vmatpush1.msra.mxu0 0.0
  %598 = vmatprep.subr.mxu0 0.0
  %599 = vmatpush1.msra.mxu0 0.0
  %600 = vmatprep.subr.mxu0 0.0
  %601 = vmatpush1.msra.mxu0 0.0
  %602 = vmatprep.subr.mxu0 0.0
  %603 = vmatpush1.msra.mxu0 0.0
  %604 = vmatprep.subr.mxu0 0.0
  %605 = vmatpush1.msra.mxu0 0.0
  %606 = vmatprep.subr.mxu0 0.0
  %607 = vmatpush1.msra.mxu0 0.0
  %608 = vmatprep.subr.mxu0 0.0
  %609 = vmatpush1.msra.mxu0 0.0
  %v610 = vand.u32 %v188, 4294901760
  %v611 = vsub.f32 %v188, %v610
  %612 = vmatprep.mubr.f32.mxu0 %v611
  %v613 = vand.u32 %v180, 4294901760
  %v614 = vsub.f32 %v180, %v613
  %615 = vmatmul.mubr.f32.gmra.mrb[0].mxu0 %v614
  %v616 = vpop.f32.mrb[0].mxu0
  %v617 = vadd.f32 %v493, %v616
  %v618 = vpop.f32.mrb[0].mxu0
  %619 = vdwg.mxu0
  %620 = vmatprep.subr.mxu0 0.0
  %v621 = vand.u32 %v20, 4294901760
  %622 = vmatpush1.msra.mxu0 %v621
  %623 = vmatprep.subr.mxu0 0.0
  %v624 = vand.u32 %v21, 4294901760
  %625 = vmatpush1.msra.mxu0 %v624
  %626 = vmatprep.subr.mxu0 0.0
  %v627 = vand.u32 %v22, 4294901760
  %628 = vmatpush1.msra.mxu0 %v627
  %629 = vmatprep.subr.mxu0 0.0
  %v630 = vand.u32 %v23, 4294901760
  %631 = vmatpush1.msra.mxu0 %v630
  %632 = vmatprep.subr.mxu0 0.0
  %v633 = vand.u32 %v24, 4294901760
  %634 = vmatpush1.msra.mxu0 %v633
  %635 = vmatprep.subr.mxu0 0.0
  %v636 = vand.u32 %v25, 4294901760
  %637 = vmatpush1.msra.mxu0 %v636
  %638 = vmatprep.subr.mxu0 0.0
  %v639 = vand.u32 %v26, 4294901760
  %640 = vmatpush1.msra.mxu0 %v639
  %641 = vmatprep.subr.mxu0 0.0
  %v642 = vand.u32 %v27, 4294901760
  %643 = vmatpush1.msra.mxu0 %v642
  %644 = vmatprep.subr.mxu0 0.0
  %v645 = vand.u32 %v28, 4294901760
  %646 = vmatpush1.msra.mxu0 %v645
  %647 = vmatprep.subr.mxu0 0.0
  %v648 = vand.u32 %v29, 4294901760
  %649 = vmatpush1.msra.mxu0 %v648
  %650 = vmatprep.subr.mxu0 0.0
  %v651 = vand.u32 %v30, 4294901760
  %652 = vmatpush1.msra.mxu0 %v651
  %653 = vmatprep.subr.mxu0 0.0
  %v654 = vand.u32 %v31, 4294901760
  %655 = vmatpush1.msra.mxu0 %v654
  %656 = vmatprep.subr.mxu0 0.0
  %v657 = vand.u32 %v32, 4294901760
  %658 = vmatpush1.msra.mxu0 %v657
  %659 = vmatprep.subr.mxu0 0.0
  %v660 = vand.u32 %v33, 4294901760
  %661 = vmatpush1.msra.mxu0 %v660
  %662 = vmatprep.subr.mxu0 0.0
  %v663 = vand.u32 %v34, 4294901760
  %664 = vmatpush1.msra.mxu0 %v663
  %665 = vmatprep.subr.mxu0 0.0
  %v666 = vand.u32 %v35, 4294901760
  %667 = vmatpush1.msra.mxu0 %v666
  %668 = vmatprep.subr.mxu0 0.0
  %v669 = vand.u32 %v36, 4294901760
  %670 = vmatpush1.msra.mxu0 %v669
  %671 = vmatprep.subr.mxu0 0.0
  %v672 = vand.u32 %v37, 4294901760
  %673 = vmatpush1.msra.mxu0 %v672
  %674 = vmatprep.subr.mxu0 0.0
  %v675 = vand.u32 %v38, 4294901760
  %676 = vmatpush1.msra.mxu0 %v675
  %677 = vmatprep.subr.mxu0 0.0
  %v678 = vand.u32 %v39, 4294901760
  %679 = vmatpush1.msra.mxu0 %v678
  %680 = vmatprep.subr.mxu0 0.0
  %v681 = vand.u32 %v40, 4294901760
  %682 = vmatpush1.msra.mxu0 %v681
  %683 = vmatprep.subr.mxu0 0.0
  %v684 = vand.u32 %v41, 4294901760
  %685 = vmatpush1.msra.mxu0 %v684
  %686 = vmatprep.subr.mxu0 0.0
  %v687 = vand.u32 %v42, 4294901760
  %688 = vmatpush1.msra.mxu0 %v687
  %689 = vmatprep.subr.mxu0 0.0
  %v690 = vand.u32 %v43, 4294901760
  %691 = vmatpush1.msra.mxu0 %v690
  %692 = vmatprep.subr.mxu0 0.0
  %v693 = vand.u32 %v192, 4294901760
  %694 = vmatpush1.msra.mxu0 %v693
  %695 = vmatprep.subr.mxu0 0.0
  %696 = vmatpush1.msra.mxu0 0.0
  %697 = vmatprep.subr.mxu0 0.0
  %698 = vmatpush1.msra.mxu0 0.0
  %699 = vmatprep.subr.mxu0 0.0
  %700 = vmatpush1.msra.mxu0 0.0
  %701 = vmatprep.subr.mxu0 0.0
  %702 = vmatpush1.msra.mxu0 0.0
  %703 = vmatprep.subr.mxu0 0.0
  %704 = vmatpush1.msra.mxu0 0.0
  %705 = vmatprep.subr.mxu0 0.0
  %706 = vmatpush1.msra.mxu0 0.0
  %707 = vmatprep.subr.mxu0 0.0
  %708 = vmatpush1.msra.mxu0 0.0
  %v709 = vand.u32 %v188, 4294901760
  %v710 = vsub.f32 %v188, %v709
  %v711 = vand.u32 %v710, 4294901760
  %712 = vmatprep.mubr.f32.mxu0 %v711
  %v713 = vand.u32 %v180, 4294901760
  %v714 = vsub.f32 %v180, %v713
  %v715 = vand.u32 %v714, 4294901760
  %716 = vmatmul.mubr.f32.gmra.mrb[0].mxu0 %v715
  %v717 = vpop.f32.mrb[0].mxu0
  %v718 = vadd.f32 %v617, %v717
  %v719 = vpop.f32.mrb[0].mxu0
  %720 = vdwg.mxu0
  %721 = vmatprep.subr.mxu0 0.0
  %v722 = vand.u32 %v20, 4294901760
  %v723 = vsub.f32 %v20, %v722
  %v724 = vand.u32 %v723, 4294901760
  %725 = vmatpush1.msra.mxu0 %v724
  %726 = vmatprep.subr.mxu0 0.0
  %v727 = vand.u32 %v21, 4294901760
  %v728 = vsub.f32 %v21, %v727
  %v729 = vand.u32 %v728, 4294901760
  %730 = vmatpush1.msra.mxu0 %v729
  %731 = vmatprep.subr.mxu0 0.0
  %v732 = vand.u32 %v22, 4294901760
  %v733 = vsub.f32 %v22, %v732
  %v734 = vand.u32 %v733, 4294901760
  %735 = vmatpush1.msra.mxu0 %v734
  %736 = vmatprep.subr.mxu0 0.0
  %v737 = vand.u32 %v23, 4294901760
  %v738 = vsub.f32 %v23, %v737
  %v739 = vand.u32 %v738, 4294901760
  %740 = vmatpush1.msra.mxu0 %v739
  %741 = vmatprep.subr.mxu0 0.0
  %v742 = vand.u32 %v24, 4294901760
  %v743 = vsub.f32 %v24, %v742
  %v744 = vand.u32 %v743, 4294901760
  %745 = vmatpush1.msra.mxu0 %v744
  %746 = vmatprep.subr.mxu0 0.0
  %v747 = vand.u32 %v25, 4294901760
  %v748 = vsub.f32 %v25, %v747
  %v749 = vand.u32 %v748, 4294901760
  %750 = vmatpush1.msra.mxu0 %v749
  %751 = vmatprep.subr.mxu0 0.0
  %v752 = vand.u32 %v26, 4294901760
  %v753 = vsub.f32 %v26, %v752
  %v754 = vand.u32 %v753, 4294901760
  %755 = vmatpush1.msra.mxu0 %v754
  %756 = vmatprep.subr.mxu0 0.0
  %v757 = vand.u32 %v27, 4294901760
  %v758 = vsub.f32 %v27, %v757
  %v759 = vand.u32 %v758, 4294901760
  %760 = vmatpush1.msra.mxu0 %v759
  %761 = vmatprep.subr.mxu0 0.0
  %v762 = vand.u32 %v28, 4294901760
  %v763 = vsub.f32 %v28, %v762
  %v764 = vand.u32 %v763, 4294901760
  %765 = vmatpush1.msra.mxu0 %v764
  %766 = vmatprep.subr.mxu0 0.0
  %v767 = vand.u32 %v29, 4294901760
  %v768 = vsub.f32 %v29, %v767
  %v769 = vand.u32 %v768, 4294901760
  %770 = vmatpush1.msra.mxu0 %v769
  %771 = vmatprep.subr.mxu0 0.0
  %v772 = vand.u32 %v30, 4294901760
  %v773 = vsub.f32 %v30, %v772
  %v774 = vand.u32 %v773, 4294901760
  %775 = vmatpush1.msra.mxu0 %v774
  %776 = vmatprep.subr.mxu0 0.0
  %v777 = vand.u32 %v31, 4294901760
  %v778 = vsub.f32 %v31, %v777
  %v779 = vand.u32 %v778, 4294901760
  %780 = vmatpush1.msra.mxu0 %v779
  %781 = vmatprep.subr.mxu0 0.0
  %v782 = vand.u32 %v32, 4294901760
  %v783 = vsub.f32 %v32, %v782
  %v784 = vand.u32 %v783, 4294901760
  %785 = vmatpush1.msra.mxu0 %v784
  %786 = vmatprep.subr.mxu0 0.0
  %v787 = vand.u32 %v33, 4294901760
  %v788 = vsub.f32 %v33, %v787
  %v789 = vand.u32 %v788, 4294901760
  %790 = vmatpush1.msra.mxu0 %v789
  %791 = vmatprep.subr.mxu0 0.0
  %v792 = vand.u32 %v34, 4294901760
  %v793 = vsub.f32 %v34, %v792
  %v794 = vand.u32 %v793, 4294901760
  %795 = vmatpush1.msra.mxu0 %v794
  %796 = vmatprep.subr.mxu0 0.0
  %v797 = vand.u32 %v35, 4294901760
  %v798 = vsub.f32 %v35, %v797
  %v799 = vand.u32 %v798, 4294901760
  %800 = vmatpush1.msra.mxu0 %v799
  %801 = vmatprep.subr.mxu0 0.0
  %v802 = vand.u32 %v36, 4294901760
  %v803 = vsub.f32 %v36, %v802
  %v804 = vand.u32 %v803, 4294901760
  %805 = vmatpush1.msra.mxu0 %v804
  %806 = vmatprep.subr.mxu0 0.0
  %v807 = vand.u32 %v37, 4294901760
  %v808 = vsub.f32 %v37, %v807
  %v809 = vand.u32 %v808, 4294901760
  %810 = vmatpush1.msra.mxu0 %v809
  %811 = vmatprep.subr.mxu0 0.0
  %v812 = vand.u32 %v38, 4294901760
  %v813 = vsub.f32 %v38, %v812
  %v814 = vand.u32 %v813, 4294901760
  %815 = vmatpush1.msra.mxu0 %v814
  %816 = vmatprep.subr.mxu0 0.0
  %v817 = vand.u32 %v39, 4294901760
  %v818 = vsub.f32 %v39, %v817
  %v819 = vand.u32 %v818, 4294901760
  %820 = vmatpush1.msra.mxu0 %v819
  %821 = vmatprep.subr.mxu0 0.0
  %v822 = vand.u32 %v40, 4294901760
  %v823 = vsub.f32 %v40, %v822
  %v824 = vand.u32 %v823, 4294901760
  %825 = vmatpush1.msra.mxu0 %v824
  %826 = vmatprep.subr.mxu0 0.0
  %v827 = vand.u32 %v41, 4294901760
  %v828 = vsub.f32 %v41, %v827
  %v829 = vand.u32 %v828, 4294901760
  %830 = vmatpush1.msra.mxu0 %v829
  %831 = vmatprep.subr.mxu0 0.0
  %v832 = vand.u32 %v42, 4294901760
  %v833 = vsub.f32 %v42, %v832
  %v834 = vand.u32 %v833, 4294901760
  %835 = vmatpush1.msra.mxu0 %v834
  %836 = vmatprep.subr.mxu0 0.0
  %v837 = vand.u32 %v43, 4294901760
  %v838 = vsub.f32 %v43, %v837
  %v839 = vand.u32 %v838, 4294901760
  %840 = vmatpush1.msra.mxu0 %v839
  %841 = vmatprep.subr.mxu0 0.0
  %v842 = vand.u32 %v192, 4294901760
  %v843 = vsub.f32 %v192, %v842
  %v844 = vand.u32 %v843, 4294901760
  %845 = vmatpush1.msra.mxu0 %v844
  %846 = vmatprep.subr.mxu0 0.0
  %847 = vmatpush1.msra.mxu0 0.0
  %848 = vmatprep.subr.mxu0 0.0
  %849 = vmatpush1.msra.mxu0 0.0
  %850 = vmatprep.subr.mxu0 0.0
  %851 = vmatpush1.msra.mxu0 0.0
  %852 = vmatprep.subr.mxu0 0.0
  %853 = vmatpush1.msra.mxu0 0.0
  %854 = vmatprep.subr.mxu0 0.0
  %855 = vmatpush1.msra.mxu0 0.0
  %856 = vmatprep.subr.mxu0 0.0
  %857 = vmatpush1.msra.mxu0 0.0
  %858 = vmatprep.subr.mxu0 0.0
  %859 = vmatpush1.msra.mxu0 0.0
  %v860 = vand.u32 %v188, 4294901760
  %861 = vmatprep.mubr.f32.mxu0 %v860
  %v862 = vand.u32 %v180, 4294901760
  %863 = vmatmul.mubr.f32.gmra.mrb[0].mxu0 %v862
  %v864 = vpop.f32.mrb[0].mxu0
  %v865 = vadd.f32 %v718, %v864
  %v866 = vpop.f32.mrb[0].mxu0
  %867 = vdwg.mxu0
  %868 = vmatprep.subr.mxu0 0.0
  %v869 = vand.u32 %v20, 4294901760
  %870 = vmatpush1.msra.mxu0 %v869
  %871 = vmatprep.subr.mxu0 0.0
  %v872 = vand.u32 %v21, 4294901760
  %873 = vmatpush1.msra.mxu0 %v872
  %874 = vmatprep.subr.mxu0 0.0
  %v875 = vand.u32 %v22, 4294901760
  %876 = vmatpush1.msra.mxu0 %v875
  %877 = vmatprep.subr.mxu0 0.0
  %v878 = vand.u32 %v23, 4294901760
  %879 = vmatpush1.msra.mxu0 %v878
  %880 = vmatprep.subr.mxu0 0.0
  %v881 = vand.u32 %v24, 4294901760
  %882 = vmatpush1.msra.mxu0 %v881
  %883 = vmatprep.subr.mxu0 0.0
  %v884 = vand.u32 %v25, 4294901760
  %885 = vmatpush1.msra.mxu0 %v884
  %886 = vmatprep.subr.mxu0 0.0
  %v887 = vand.u32 %v26, 4294901760
  %888 = vmatpush1.msra.mxu0 %v887
  %889 = vmatprep.subr.mxu0 0.0
  %v890 = vand.u32 %v27, 4294901760
  %891 = vmatpush1.msra.mxu0 %v890
  %892 = vmatprep.subr.mxu0 0.0
  %v893 = vand.u32 %v28, 4294901760
  %894 = vmatpush1.msra.mxu0 %v893
  %895 = vmatprep.subr.mxu0 0.0
  %v896 = vand.u32 %v29, 4294901760
  %897 = vmatpush1.msra.mxu0 %v896
  %898 = vmatprep.subr.mxu0 0.0
  %v899 = vand.u32 %v30, 4294901760
  %900 = vmatpush1.msra.mxu0 %v899
  %901 = vmatprep.subr.mxu0 0.0
  %v902 = vand.u32 %v31, 4294901760
  %903 = vmatpush1.msra.mxu0 %v902
  %904 = vmatprep.subr.mxu0 0.0
  %v905 = vand.u32 %v32, 4294901760
  %906 = vmatpush1.msra.mxu0 %v905
  %907 = vmatprep.subr.mxu0 0.0
  %v908 = vand.u32 %v33, 4294901760
  %909 = vmatpush1.msra.mxu0 %v908
  %910 = vmatprep.subr.mxu0 0.0
  %v911 = vand.u32 %v34, 4294901760
  %912 = vmatpush1.msra.mxu0 %v911
  %913 = vmatprep.subr.mxu0 0.0
  %v914 = vand.u32 %v35, 4294901760
  %915 = vmatpush1.msra.mxu0 %v914
  %916 = vmatprep.subr.mxu0 0.0
  %v917 = vand.u32 %v36, 4294901760
  %918 = vmatpush1.msra.mxu0 %v917
  %919 = vmatprep.subr.mxu0 0.0
  %v920 = vand.u32 %v37, 4294901760
  %921 = vmatpush1.msra.mxu0 %v920
  %922 = vmatprep.subr.mxu0 0.0
  %v923 = vand.u32 %v38, 4294901760
  %924 = vmatpush1.msra.mxu0 %v923
  %925 = vmatprep.subr.mxu0 0.0
  %v926 = vand.u32 %v39, 4294901760
  %927 = vmatpush1.msra.mxu0 %v926
  %928 = vmatprep.subr.mxu0 0.0
  %v929 = vand.u32 %v40, 4294901760
  %930 = vmatpush1.msra.mxu0 %v929
  %931 = vmatprep.subr.mxu0 0.0
  %v932 = vand.u32 %v41, 4294901760
  %933 = vmatpush1.msra.mxu0 %v932
  %934 = vmatprep.subr.mxu0 0.0
  %v935 = vand.u32 %v42, 4294901760
  %936 = vmatpush1.msra.mxu0 %v935
  %937 = vmatprep.subr.mxu0 0.0
  %v938 = vand.u32 %v43, 4294901760
  %939 = vmatpush1.msra.mxu0 %v938
  %940 = vmatprep.subr.mxu0 0.0
  %v941 = vand.u32 %v192, 4294901760
  %942 = vmatpush1.msra.mxu0 %v941
  %943 = vmatprep.subr.mxu0 0.0
  %944 = vmatpush1.msra.mxu0 0.0
  %945 = vmatprep.subr.mxu0 0.0
  %946 = vmatpush1.msra.mxu0 0.0
  %947 = vmatprep.subr.mxu0 0.0
  %948 = vmatpush1.msra.mxu0 0.0
  %949 = vmatprep.subr.mxu0 0.0
  %950 = vmatpush1.msra.mxu0 0.0
  %951 = vmatprep.subr.mxu0 0.0
  %952 = vmatpush1.msra.mxu0 0.0
  %953 = vmatprep.subr.mxu0 0.0
  %954 = vmatpush1.msra.mxu0 0.0
  %955 = vmatprep.subr.mxu0 0.0
  %956 = vmatpush1.msra.mxu0 0.0
  %v957 = vand.u32 %v188, 4294901760
  %958 = vmatprep.mubr.f32.mxu0 %v957
  %v959 = vand.u32 %v180, 4294901760
  %960 = vmatmul.mubr.f32.gmra.mrb[0].mxu0 %v959
  %v961 = vpop.f32.mrb[0].mxu0
  %v962 = vadd.f32 %v865, %v961
  %v963 = vpop.f32.mrb[0].mxu0
  %964 = vdwg.mxu0
  %v965 = vsub.f32 0.0, %v962
  %v966 = vmul.f32 %v965, 1.442695
  %v967 = vpow.pop %v966
  %v968 = vadd.f32 %v967, 1.0
  %v969 = vrcp.pop %v968
  %v970 = vlaneseq
  %v971 = vshrl.u32 %v970, 7
  %v972 = vsub.s32 0, %v971
  %v973 = vrot.slane %v969, %v972
  %v974 = vmul.f32 %v52, %v973
  %v975 = vmul.f32 %v53, %v973
  %977 = vrot.lane.b32.xlu0 %v973, 79
  %v978 = vpop.permute.xlu0 %977
  %v980 = vmul.f32 %v54, %v978
  %v981 = vmul.f32 %v55, %v978
  %v982 = vsel %vm56, %v974, -inf
  %983 = vmax.xlane.f32.xlu0 %v982
  %v984 = vpop.xlane.xlu0 %983
  %v985 = vsel %vm56, %v975, -inf
  %986 = vmax.xlane.f32.xlu0 %v985
  %v987 = vpop.xlane.xlu0 %986
  %v988 = vsel %vm56, %v980, -inf
  %989 = vmax.xlane.f32.xlu0 %v988
  %v990 = vpop.xlane.xlu0 %989
  %v991 = vsel %vm56, %v981, -inf
  %992 = vmax.xlane.f32.xlu0 %v991
  %v993 = vpop.xlane.xlu0 %992
  %v994 = vsel %vm56, %v974, 0.0
  %995 = vadd.xlane.f32.xlu0 %v994
  %v996 = vpop.xlane.xlu0 %995
  %v997 = vsel %vm56, %v975, 0.0
  %998 = vadd.xlane.f32.xlu0 %v997
  %v999 = vpop.xlane.xlu0 %998
  %v1000 = vsel %vm56, %v980, 0.0
  %1001 = vadd.xlane.f32.xlu0 %v1000
  %v1002 = vpop.xlane.xlu0 %1001
  %v1003 = vsel %vm56, %v981, 0.0
  %1004 = vadd.xlane.f32.xlu0 %v1003
  %v1005 = vpop.xlane.xlu0 %1004
  %v1006 = vmul.f32 %v996, 0.020408163
  %v1007 = vmul.f32 %v999, 0.020408163
  %v1008 = vmul.f32 %v1002, 0.020408163
  %v1009 = vmul.f32 %v1005, 0.020408163
  %v1010 = vlaneseq
  %v1011 = vshrl.u32 %v1010, 7
  %v1012 = vsub.s32 1, %v1011
  %v1013 = vrot.slane %v969, %v1012
  %v1014 = vmul.f32 %v113, %v1013
  %v1015 = vmul.f32 %v115, %v1013
  %1017 = vrot.lane.b32.xlu0 %v1013, 79
  %v1018 = vpop.permute.xlu0 %1017
  %v1020 = vmul.f32 %v117, %v1018
  %v1021 = vmul.f32 %v119, %v1018
  %v1022 = vsel %vm56, %v1014, -inf
  %1023 = vmax.xlane.f32.xlu0 %v1022
  %v1024 = vpop.xlane.xlu0 %1023
  %v1025 = vsel %vm56, %v1015, -inf
  %1026 = vmax.xlane.f32.xlu0 %v1025
  %v1027 = vpop.xlane.xlu0 %1026
  %v1028 = vsel %vm56, %v1020, -inf
  %1029 = vmax.xlane.f32.xlu0 %v1028
  %v1030 = vpop.xlane.xlu0 %1029
  %v1031 = vsel %vm56, %v1021, -inf
  %1032 = vmax.xlane.f32.xlu0 %v1031
  %v1033 = vpop.xlane.xlu0 %1032
  %v1034 = vsel %vm56, %v1014, 0.0
  %1035 = vadd.xlane.f32.xlu0 %v1034
  %v1036 = vpop.xlane.xlu0 %1035
  %v1037 = vsel %vm56, %v1015, 0.0
  %1038 = vadd.xlane.f32.xlu0 %v1037
  %v1039 = vpop.xlane.xlu0 %1038
  %v1040 = vsel %vm56, %v1020, 0.0
  %1041 = vadd.xlane.f32.xlu0 %v1040
  %v1042 = vpop.xlane.xlu0 %1041
  %v1043 = vsel %vm56, %v1021, 0.0
  %1044 = vadd.xlane.f32.xlu0 %v1043
  %v1045 = vpop.xlane.xlu0 %1044
  %v1046 = vmul.f32 %v1036, 0.020408163
  %v1047 = vmul.f32 %v1039, 0.020408163
  %v1048 = vmul.f32 %v1042, 0.020408163
  %v1049 = vmul.f32 %v1045, 0.020408163
  %vm1050 = vcmask 7168
  %v1051 = vsel %vm1050, %v984, %v1024
  %v1052 = vsel %vm1050, %v987, %v1027
  %v1053 = vsel %vm1050, %v990, %v1030
  %v1054 = vsel %vm1050, %v993, %v1033
  %vm1055 = vcmask 15360
  %v1056 = vsel %vm1055, %v1051, %v1006
  %v1057 = vsel %vm1055, %v1052, %v1007
  %v1058 = vsel %vm1055, %v1053, %v1008
  %v1059 = vsel %vm1055, %v1054, %v1009
  %vm1060 = vcmask 23552
  %v1061 = vsel %vm1060, %v1056, %v1046
  %v1062 = vsel %vm1060, %v1057, %v1047
  %v1063 = vsel %vm1060, %v1058, %v1048
  %v1064 = vsel %vm1060, %v1059, %v1049
  %vm1065 = vcmask 261120
  %v1067 = vsel %vm1065, %v46, 0
  %1069 = vmatprep.subr.mxu0 0.0
  %v1070 = vand.u32 %v1061, 4294901760
  %1071 = vmatpush1.msra.mxu0 %v1070
  %1072 = vmatprep.subr.mxu0 0.0
  %v1073 = vand.u32 %v1062, 4294901760
  %1074 = vmatpush1.msra.mxu0 %v1073
  %1075 = vmatprep.subr.mxu0 0.0
  %v1076 = vand.u32 %v1063, 4294901760
  %1077 = vmatpush1.msra.mxu0 %v1076
  %1078 = vmatprep.subr.mxu0 0.0
  %v1079 = vand.u32 %v1064, 4294901760
  %1080 = vmatpush1.msra.mxu0 %v1079
  %1081 = vmatprep.subr.mxu0 0.0
  %1082 = vmatpush1.msra.mxu0 0.0
  %1083 = vmatprep.subr.mxu0 0.0
  %1084 = vmatpush1.msra.mxu0 0.0
  %1085 = vmatprep.subr.mxu0 0.0
  %1086 = vmatpush1.msra.mxu0 0.0
  %1087 = vmatprep.subr.mxu0 0.0
  %1088 = vmatpush1.msra.mxu0 0.0
  %1089 = vmatprep.subr.mxu0 0.0
  %1090 = vmatpush1.msra.mxu0 0.0
  %1091 = vmatprep.subr.mxu0 0.0
  %1092 = vmatpush1.msra.mxu0 0.0
  %1093 = vmatprep.subr.mxu0 0.0
  %1094 = vmatpush1.msra.mxu0 0.0
  %1095 = vmatprep.subr.mxu0 0.0
  %1096 = vmatpush1.msra.mxu0 0.0
  %1097 = vmatprep.subr.mxu0 0.0
  %1098 = vmatpush1.msra.mxu0 0.0
  %1099 = vmatprep.subr.mxu0 0.0
  %1100 = vmatpush1.msra.mxu0 0.0
  %1101 = vmatprep.subr.mxu0 0.0
  %1102 = vmatpush1.msra.mxu0 0.0
  %1103 = vmatprep.subr.mxu0 0.0
  %1104 = vmatpush1.msra.mxu0 0.0
  %1105 = vmatprep.subr.mxu0 0.0
  %1106 = vmatpush1.msra.mxu0 0.0
  %1107 = vmatprep.subr.mxu0 0.0
  %1108 = vmatpush1.msra.mxu0 0.0
  %1109 = vmatprep.subr.mxu0 0.0
  %1110 = vmatpush1.msra.mxu0 0.0
  %1111 = vmatprep.subr.mxu0 0.0
  %1112 = vmatpush1.msra.mxu0 0.0
  %1113 = vmatprep.subr.mxu0 0.0
  %1114 = vmatpush1.msra.mxu0 0.0
  %1115 = vmatprep.subr.mxu0 0.0
  %1116 = vmatpush1.msra.mxu0 0.0
  %1117 = vmatprep.subr.mxu0 0.0
  %1118 = vmatpush1.msra.mxu0 0.0
  %1119 = vmatprep.subr.mxu0 0.0
  %1120 = vmatpush1.msra.mxu0 0.0
  %1121 = vmatprep.subr.mxu0 0.0
  %1122 = vmatpush1.msra.mxu0 0.0
  %1123 = vmatprep.subr.mxu0 0.0
  %1124 = vmatpush1.msra.mxu0 0.0
  %1125 = vmatprep.subr.mxu0 0.0
  %1126 = vmatpush1.msra.mxu0 0.0
  %1127 = vmatprep.subr.mxu0 0.0
  %1128 = vmatpush1.msra.mxu0 0.0
  %1129 = vmatprep.subr.mxu0 0.0
  %1130 = vmatpush1.msra.mxu0 0.0
  %1131 = vmatprep.subr.mxu0 0.0
  %1132 = vmatpush1.msra.mxu0 0.0
  %1133 = vmatprep.subr.mxu0 0.0
  %1134 = vmatpush1.msra.mxu0 0.0
  %1135 = vmatprep.subr.mxu0 0.0
  %1136 = vmatpush1.msra.mxu0 0.0
  %1137 = vmatprep.mubr.f32.mxu0 0.0
  %v1138 = vand.u32 %v1067, 4294901760
  %v1139 = vsub.f32 %v1067, %v1138
  %v1140 = vand.u32 %v1139, 4294901760
  %v1141 = vsub.f32 %v1139, %v1140
  %v1142 = vand.u32 %v1141, 4294901760
  %1143 = vmatmul.mubr.f32.gmra.mrb[0].mxu0 %v1142
  %v1144 = vpop.f32.mrb[0].mxu0
  %v1145 = vadd.f32 0.0, %v1144
  %v1146 = vpop.f32.mrb[0].mxu0
  %1147 = vdwg.mxu0
  %1148 = vmatprep.subr.mxu0 0.0
  %v1149 = vand.u32 %v1061, 4294901760
  %v1150 = vsub.f32 %v1061, %v1149
  %v1151 = vand.u32 %v1150, 4294901760
  %v1152 = vsub.f32 %v1150, %v1151
  %v1153 = vand.u32 %v1152, 4294901760
  %1154 = vmatpush1.msra.mxu0 %v1153
  %1155 = vmatprep.subr.mxu0 0.0
  %v1156 = vand.u32 %v1062, 4294901760
  %v1157 = vsub.f32 %v1062, %v1156
  %v1158 = vand.u32 %v1157, 4294901760
  %v1159 = vsub.f32 %v1157, %v1158
  %v1160 = vand.u32 %v1159, 4294901760
  %1161 = vmatpush1.msra.mxu0 %v1160
  %1162 = vmatprep.subr.mxu0 0.0
  %v1163 = vand.u32 %v1063, 4294901760
  %v1164 = vsub.f32 %v1063, %v1163
  %v1165 = vand.u32 %v1164, 4294901760
  %v1166 = vsub.f32 %v1164, %v1165
  %v1167 = vand.u32 %v1166, 4294901760
  %1168 = vmatpush1.msra.mxu0 %v1167
  %1169 = vmatprep.subr.mxu0 0.0
  %v1170 = vand.u32 %v1064, 4294901760
  %v1171 = vsub.f32 %v1064, %v1170
  %v1172 = vand.u32 %v1171, 4294901760
  %v1173 = vsub.f32 %v1171, %v1172
  %v1174 = vand.u32 %v1173, 4294901760
  %1175 = vmatpush1.msra.mxu0 %v1174
  %1176 = vmatprep.subr.mxu0 0.0
  %1177 = vmatpush1.msra.mxu0 0.0
  %1178 = vmatprep.subr.mxu0 0.0
  %1179 = vmatpush1.msra.mxu0 0.0
  %1180 = vmatprep.subr.mxu0 0.0
  %1181 = vmatpush1.msra.mxu0 0.0
  %1182 = vmatprep.subr.mxu0 0.0
  %1183 = vmatpush1.msra.mxu0 0.0
  %1184 = vmatprep.subr.mxu0 0.0
  %1185 = vmatpush1.msra.mxu0 0.0
  %1186 = vmatprep.subr.mxu0 0.0
  %1187 = vmatpush1.msra.mxu0 0.0
  %1188 = vmatprep.subr.mxu0 0.0
  %1189 = vmatpush1.msra.mxu0 0.0
  %1190 = vmatprep.subr.mxu0 0.0
  %1191 = vmatpush1.msra.mxu0 0.0
  %1192 = vmatprep.subr.mxu0 0.0
  %1193 = vmatpush1.msra.mxu0 0.0
  %1194 = vmatprep.subr.mxu0 0.0
  %1195 = vmatpush1.msra.mxu0 0.0
  %1196 = vmatprep.subr.mxu0 0.0
  %1197 = vmatpush1.msra.mxu0 0.0
  %1198 = vmatprep.subr.mxu0 0.0
  %1199 = vmatpush1.msra.mxu0 0.0
  %1200 = vmatprep.subr.mxu0 0.0
  %1201 = vmatpush1.msra.mxu0 0.0
  %1202 = vmatprep.subr.mxu0 0.0
  %1203 = vmatpush1.msra.mxu0 0.0
  %1204 = vmatprep.subr.mxu0 0.0
  %1205 = vmatpush1.msra.mxu0 0.0
  %1206 = vmatprep.subr.mxu0 0.0
  %1207 = vmatpush1.msra.mxu0 0.0
  %1208 = vmatprep.subr.mxu0 0.0
  %1209 = vmatpush1.msra.mxu0 0.0
  %1210 = vmatprep.subr.mxu0 0.0
  %1211 = vmatpush1.msra.mxu0 0.0
  %1212 = vmatprep.subr.mxu0 0.0
  %1213 = vmatpush1.msra.mxu0 0.0
  %1214 = vmatprep.subr.mxu0 0.0
  %1215 = vmatpush1.msra.mxu0 0.0
  %1216 = vmatprep.subr.mxu0 0.0
  %1217 = vmatpush1.msra.mxu0 0.0
  %1218 = vmatprep.subr.mxu0 0.0
  %1219 = vmatpush1.msra.mxu0 0.0
  %1220 = vmatprep.subr.mxu0 0.0
  %1221 = vmatpush1.msra.mxu0 0.0
  %1222 = vmatprep.subr.mxu0 0.0
  %1223 = vmatpush1.msra.mxu0 0.0
  %1224 = vmatprep.subr.mxu0 0.0
  %1225 = vmatpush1.msra.mxu0 0.0
  %1226 = vmatprep.subr.mxu0 0.0
  %1227 = vmatpush1.msra.mxu0 0.0
  %1228 = vmatprep.subr.mxu0 0.0
  %1229 = vmatpush1.msra.mxu0 0.0
  %1230 = vmatprep.subr.mxu0 0.0
  %1231 = vmatpush1.msra.mxu0 0.0
  %1232 = vmatprep.mubr.f32.mxu0 0.0
  %v1233 = vand.u32 %v1067, 4294901760
  %1234 = vmatmul.mubr.f32.gmra.mrb[0].mxu0 %v1233
  %v1235 = vpop.f32.mrb[0].mxu0
  %v1236 = vadd.f32 %v1145, %v1235
  %v1237 = vpop.f32.mrb[0].mxu0
  %1238 = vdwg.mxu0
  %1239 = vmatprep.subr.mxu0 0.0
  %v1240 = vand.u32 %v1061, 4294901760
  %v1241 = vsub.f32 %v1061, %v1240
  %1242 = vmatpush1.msra.mxu0 %v1241
  %1243 = vmatprep.subr.mxu0 0.0
  %v1244 = vand.u32 %v1062, 4294901760
  %v1245 = vsub.f32 %v1062, %v1244
  %1246 = vmatpush1.msra.mxu0 %v1245
  %1247 = vmatprep.subr.mxu0 0.0
  %v1248 = vand.u32 %v1063, 4294901760
  %v1249 = vsub.f32 %v1063, %v1248
  %1250 = vmatpush1.msra.mxu0 %v1249
  %1251 = vmatprep.subr.mxu0 0.0
  %v1252 = vand.u32 %v1064, 4294901760
  %v1253 = vsub.f32 %v1064, %v1252
  %1254 = vmatpush1.msra.mxu0 %v1253
  %1255 = vmatprep.subr.mxu0 0.0
  %1256 = vmatpush1.msra.mxu0 0.0
  %1257 = vmatprep.subr.mxu0 0.0
  %1258 = vmatpush1.msra.mxu0 0.0
  %1259 = vmatprep.subr.mxu0 0.0
  %1260 = vmatpush1.msra.mxu0 0.0
  %1261 = vmatprep.subr.mxu0 0.0
  %1262 = vmatpush1.msra.mxu0 0.0
  %1263 = vmatprep.subr.mxu0 0.0
  %1264 = vmatpush1.msra.mxu0 0.0
  %1265 = vmatprep.subr.mxu0 0.0
  %1266 = vmatpush1.msra.mxu0 0.0
  %1267 = vmatprep.subr.mxu0 0.0
  %1268 = vmatpush1.msra.mxu0 0.0
  %1269 = vmatprep.subr.mxu0 0.0
  %1270 = vmatpush1.msra.mxu0 0.0
  %1271 = vmatprep.subr.mxu0 0.0
  %1272 = vmatpush1.msra.mxu0 0.0
  %1273 = vmatprep.subr.mxu0 0.0
  %1274 = vmatpush1.msra.mxu0 0.0
  %1275 = vmatprep.subr.mxu0 0.0
  %1276 = vmatpush1.msra.mxu0 0.0
  %1277 = vmatprep.subr.mxu0 0.0
  %1278 = vmatpush1.msra.mxu0 0.0
  %1279 = vmatprep.subr.mxu0 0.0
  %1280 = vmatpush1.msra.mxu0 0.0
  %1281 = vmatprep.subr.mxu0 0.0
  %1282 = vmatpush1.msra.mxu0 0.0
  %1283 = vmatprep.subr.mxu0 0.0
  %1284 = vmatpush1.msra.mxu0 0.0
  %1285 = vmatprep.subr.mxu0 0.0
  %1286 = vmatpush1.msra.mxu0 0.0
  %1287 = vmatprep.subr.mxu0 0.0
  %1288 = vmatpush1.msra.mxu0 0.0
  %1289 = vmatprep.subr.mxu0 0.0
  %1290 = vmatpush1.msra.mxu0 0.0
  %1291 = vmatprep.subr.mxu0 0.0
  %1292 = vmatpush1.msra.mxu0 0.0
  %1293 = vmatprep.subr.mxu0 0.0
  %1294 = vmatpush1.msra.mxu0 0.0
  %1295 = vmatprep.subr.mxu0 0.0
  %1296 = vmatpush1.msra.mxu0 0.0
  %1297 = vmatprep.subr.mxu0 0.0
  %1298 = vmatpush1.msra.mxu0 0.0
  %1299 = vmatprep.subr.mxu0 0.0
  %1300 = vmatpush1.msra.mxu0 0.0
  %1301 = vmatprep.subr.mxu0 0.0
  %1302 = vmatpush1.msra.mxu0 0.0
  %1303 = vmatprep.subr.mxu0 0.0
  %1304 = vmatpush1.msra.mxu0 0.0
  %1305 = vmatprep.subr.mxu0 0.0
  %1306 = vmatpush1.msra.mxu0 0.0
  %1307 = vmatprep.subr.mxu0 0.0
  %1308 = vmatpush1.msra.mxu0 0.0
  %1309 = vmatprep.subr.mxu0 0.0
  %1310 = vmatpush1.msra.mxu0 0.0
  %1311 = vmatprep.mubr.f32.mxu0 0.0
  %v1312 = vand.u32 %v1067, 4294901760
  %v1313 = vsub.f32 %v1067, %v1312
  %1314 = vmatmul.mubr.f32.gmra.mrb[0].mxu0 %v1313
  %v1315 = vpop.f32.mrb[0].mxu0
  %v1316 = vadd.f32 %v1236, %v1315
  %v1317 = vpop.f32.mrb[0].mxu0
  %1318 = vdwg.mxu0
  %1319 = vmatprep.subr.mxu0 0.0
  %v1320 = vand.u32 %v1061, 4294901760
  %1321 = vmatpush1.msra.mxu0 %v1320
  %1322 = vmatprep.subr.mxu0 0.0
  %v1323 = vand.u32 %v1062, 4294901760
  %1324 = vmatpush1.msra.mxu0 %v1323
  %1325 = vmatprep.subr.mxu0 0.0
  %v1326 = vand.u32 %v1063, 4294901760
  %1327 = vmatpush1.msra.mxu0 %v1326
  %1328 = vmatprep.subr.mxu0 0.0
  %v1329 = vand.u32 %v1064, 4294901760
  %1330 = vmatpush1.msra.mxu0 %v1329
  %1331 = vmatprep.subr.mxu0 0.0
  %1332 = vmatpush1.msra.mxu0 0.0
  %1333 = vmatprep.subr.mxu0 0.0
  %1334 = vmatpush1.msra.mxu0 0.0
  %1335 = vmatprep.subr.mxu0 0.0
  %1336 = vmatpush1.msra.mxu0 0.0
  %1337 = vmatprep.subr.mxu0 0.0
  %1338 = vmatpush1.msra.mxu0 0.0
  %1339 = vmatprep.subr.mxu0 0.0
  %1340 = vmatpush1.msra.mxu0 0.0
  %1341 = vmatprep.subr.mxu0 0.0
  %1342 = vmatpush1.msra.mxu0 0.0
  %1343 = vmatprep.subr.mxu0 0.0
  %1344 = vmatpush1.msra.mxu0 0.0
  %1345 = vmatprep.subr.mxu0 0.0
  %1346 = vmatpush1.msra.mxu0 0.0
  %1347 = vmatprep.subr.mxu0 0.0
  %1348 = vmatpush1.msra.mxu0 0.0
  %1349 = vmatprep.subr.mxu0 0.0
  %1350 = vmatpush1.msra.mxu0 0.0
  %1351 = vmatprep.subr.mxu0 0.0
  %1352 = vmatpush1.msra.mxu0 0.0
  %1353 = vmatprep.subr.mxu0 0.0
  %1354 = vmatpush1.msra.mxu0 0.0
  %1355 = vmatprep.subr.mxu0 0.0
  %1356 = vmatpush1.msra.mxu0 0.0
  %1357 = vmatprep.subr.mxu0 0.0
  %1358 = vmatpush1.msra.mxu0 0.0
  %1359 = vmatprep.subr.mxu0 0.0
  %1360 = vmatpush1.msra.mxu0 0.0
  %1361 = vmatprep.subr.mxu0 0.0
  %1362 = vmatpush1.msra.mxu0 0.0
  %1363 = vmatprep.subr.mxu0 0.0
  %1364 = vmatpush1.msra.mxu0 0.0
  %1365 = vmatprep.subr.mxu0 0.0
  %1366 = vmatpush1.msra.mxu0 0.0
  %1367 = vmatprep.subr.mxu0 0.0
  %1368 = vmatpush1.msra.mxu0 0.0
  %1369 = vmatprep.subr.mxu0 0.0
  %1370 = vmatpush1.msra.mxu0 0.0
  %1371 = vmatprep.subr.mxu0 0.0
  %1372 = vmatpush1.msra.mxu0 0.0
  %1373 = vmatprep.subr.mxu0 0.0
  %1374 = vmatpush1.msra.mxu0 0.0
  %1375 = vmatprep.subr.mxu0 0.0
  %1376 = vmatpush1.msra.mxu0 0.0
  %1377 = vmatprep.subr.mxu0 0.0
  %1378 = vmatpush1.msra.mxu0 0.0
  %1379 = vmatprep.subr.mxu0 0.0
  %1380 = vmatpush1.msra.mxu0 0.0
  %1381 = vmatprep.subr.mxu0 0.0
  %1382 = vmatpush1.msra.mxu0 0.0
  %1383 = vmatprep.subr.mxu0 0.0
  %1384 = vmatpush1.msra.mxu0 0.0
  %1385 = vmatprep.subr.mxu0 0.0
  %1386 = vmatpush1.msra.mxu0 0.0
  %1387 = vmatprep.mubr.f32.mxu0 0.0
  %v1388 = vand.u32 %v1067, 4294901760
  %v1389 = vsub.f32 %v1067, %v1388
  %v1390 = vand.u32 %v1389, 4294901760
  %1391 = vmatmul.mubr.f32.gmra.mrb[0].mxu0 %v1390
  %v1392 = vpop.f32.mrb[0].mxu0
  %v1393 = vadd.f32 %v1316, %v1392
  %v1394 = vpop.f32.mrb[0].mxu0
  %1395 = vdwg.mxu0
  %1396 = vmatprep.subr.mxu0 0.0
  %v1397 = vand.u32 %v1061, 4294901760
  %v1398 = vsub.f32 %v1061, %v1397
  %v1399 = vand.u32 %v1398, 4294901760
  %1400 = vmatpush1.msra.mxu0 %v1399
  %1401 = vmatprep.subr.mxu0 0.0
  %v1402 = vand.u32 %v1062, 4294901760
  %v1403 = vsub.f32 %v1062, %v1402
  %v1404 = vand.u32 %v1403, 4294901760
  %1405 = vmatpush1.msra.mxu0 %v1404
  %1406 = vmatprep.subr.mxu0 0.0
  %v1407 = vand.u32 %v1063, 4294901760
  %v1408 = vsub.f32 %v1063, %v1407
  %v1409 = vand.u32 %v1408, 4294901760
  %1410 = vmatpush1.msra.mxu0 %v1409
  %1411 = vmatprep.subr.mxu0 0.0
  %v1412 = vand.u32 %v1064, 4294901760
  %v1413 = vsub.f32 %v1064, %v1412
  %v1414 = vand.u32 %v1413, 4294901760
  %1415 = vmatpush1.msra.mxu0 %v1414
  %1416 = vmatprep.subr.mxu0 0.0
  %1417 = vmatpush1.msra.mxu0 0.0
  %1418 = vmatprep.subr.mxu0 0.0
  %1419 = vmatpush1.msra.mxu0 0.0
  %1420 = vmatprep.subr.mxu0 0.0
  %1421 = vmatpush1.msra.mxu0 0.0
  %1422 = vmatprep.subr.mxu0 0.0
  %1423 = vmatpush1.msra.mxu0 0.0
  %1424 = vmatprep.subr.mxu0 0.0
  %1425 = vmatpush1.msra.mxu0 0.0
  %1426 = vmatprep.subr.mxu0 0.0
  %1427 = vmatpush1.msra.mxu0 0.0
  %1428 = vmatprep.subr.mxu0 0.0
  %1429 = vmatpush1.msra.mxu0 0.0
  %1430 = vmatprep.subr.mxu0 0.0
  %1431 = vmatpush1.msra.mxu0 0.0
  %1432 = vmatprep.subr.mxu0 0.0
  %1433 = vmatpush1.msra.mxu0 0.0
  %1434 = vmatprep.subr.mxu0 0.0
  %1435 = vmatpush1.msra.mxu0 0.0
  %1436 = vmatprep.subr.mxu0 0.0
  %1437 = vmatpush1.msra.mxu0 0.0
  %1438 = vmatprep.subr.mxu0 0.0
  %1439 = vmatpush1.msra.mxu0 0.0
  %1440 = vmatprep.subr.mxu0 0.0
  %1441 = vmatpush1.msra.mxu0 0.0
  %1442 = vmatprep.subr.mxu0 0.0
  %1443 = vmatpush1.msra.mxu0 0.0
  %1444 = vmatprep.subr.mxu0 0.0
  %1445 = vmatpush1.msra.mxu0 0.0
  %1446 = vmatprep.subr.mxu0 0.0
  %1447 = vmatpush1.msra.mxu0 0.0
  %1448 = vmatprep.subr.mxu0 0.0
  %1449 = vmatpush1.msra.mxu0 0.0
  %1450 = vmatprep.subr.mxu0 0.0
  %1451 = vmatpush1.msra.mxu0 0.0
  %1452 = vmatprep.subr.mxu0 0.0
  %1453 = vmatpush1.msra.mxu0 0.0
  %1454 = vmatprep.subr.mxu0 0.0
  %1455 = vmatpush1.msra.mxu0 0.0
  %1456 = vmatprep.subr.mxu0 0.0
  %1457 = vmatpush1.msra.mxu0 0.0
  %1458 = vmatprep.subr.mxu0 0.0
  %1459 = vmatpush1.msra.mxu0 0.0
  %1460 = vmatprep.subr.mxu0 0.0
  %1461 = vmatpush1.msra.mxu0 0.0
  %1462 = vmatprep.subr.mxu0 0.0
  %1463 = vmatpush1.msra.mxu0 0.0
  %1464 = vmatprep.subr.mxu0 0.0
  %1465 = vmatpush1.msra.mxu0 0.0
  %1466 = vmatprep.subr.mxu0 0.0
  %1467 = vmatpush1.msra.mxu0 0.0
  %1468 = vmatprep.subr.mxu0 0.0
  %1469 = vmatpush1.msra.mxu0 0.0
  %1470 = vmatprep.subr.mxu0 0.0
  %1471 = vmatpush1.msra.mxu0 0.0
  %1472 = vmatprep.mubr.f32.mxu0 0.0
  %v1473 = vand.u32 %v1067, 4294901760
  %1474 = vmatmul.mubr.f32.gmra.mrb[0].mxu0 %v1473
  %v1475 = vpop.f32.mrb[0].mxu0
  %v1476 = vadd.f32 %v1393, %v1475
  %v1477 = vpop.f32.mrb[0].mxu0
  %1478 = vdwg.mxu0
  %1479 = vmatprep.subr.mxu0 0.0
  %v1480 = vand.u32 %v1061, 4294901760
  %1481 = vmatpush1.msra.mxu0 %v1480
  %1482 = vmatprep.subr.mxu0 0.0
  %v1483 = vand.u32 %v1062, 4294901760
  %1484 = vmatpush1.msra.mxu0 %v1483
  %1485 = vmatprep.subr.mxu0 0.0
  %v1486 = vand.u32 %v1063, 4294901760
  %1487 = vmatpush1.msra.mxu0 %v1486
  %1488 = vmatprep.subr.mxu0 0.0
  %v1489 = vand.u32 %v1064, 4294901760
  %1490 = vmatpush1.msra.mxu0 %v1489
  %1491 = vmatprep.subr.mxu0 0.0
  %1492 = vmatpush1.msra.mxu0 0.0
  %1493 = vmatprep.subr.mxu0 0.0
  %1494 = vmatpush1.msra.mxu0 0.0
  %1495 = vmatprep.subr.mxu0 0.0
  %1496 = vmatpush1.msra.mxu0 0.0
  %1497 = vmatprep.subr.mxu0 0.0
  %1498 = vmatpush1.msra.mxu0 0.0
  %1499 = vmatprep.subr.mxu0 0.0
  %1500 = vmatpush1.msra.mxu0 0.0
  %1501 = vmatprep.subr.mxu0 0.0
  %1502 = vmatpush1.msra.mxu0 0.0
  %1503 = vmatprep.subr.mxu0 0.0
  %1504 = vmatpush1.msra.mxu0 0.0
  %1505 = vmatprep.subr.mxu0 0.0
  %1506 = vmatpush1.msra.mxu0 0.0
  %1507 = vmatprep.subr.mxu0 0.0
  %1508 = vmatpush1.msra.mxu0 0.0
  %1509 = vmatprep.subr.mxu0 0.0
  %1510 = vmatpush1.msra.mxu0 0.0
  %1511 = vmatprep.subr.mxu0 0.0
  %1512 = vmatpush1.msra.mxu0 0.0
  %1513 = vmatprep.subr.mxu0 0.0
  %1514 = vmatpush1.msra.mxu0 0.0
  %1515 = vmatprep.subr.mxu0 0.0
  %1516 = vmatpush1.msra.mxu0 0.0
  %1517 = vmatprep.subr.mxu0 0.0
  %1518 = vmatpush1.msra.mxu0 0.0
  %1519 = vmatprep.subr.mxu0 0.0
  %1520 = vmatpush1.msra.mxu0 0.0
  %1521 = vmatprep.subr.mxu0 0.0
  %1522 = vmatpush1.msra.mxu0 0.0
  %1523 = vmatprep.subr.mxu0 0.0
  %1524 = vmatpush1.msra.mxu0 0.0
  %1525 = vmatprep.subr.mxu0 0.0
  %1526 = vmatpush1.msra.mxu0 0.0
  %1527 = vmatprep.subr.mxu0 0.0
  %1528 = vmatpush1.msra.mxu0 0.0
  %1529 = vmatprep.subr.mxu0 0.0
  %1530 = vmatpush1.msra.mxu0 0.0
  %1531 = vmatprep.subr.mxu0 0.0
  %1532 = vmatpush1.msra.mxu0 0.0
  %1533 = vmatprep.subr.mxu0 0.0
  %1534 = vmatpush1.msra.mxu0 0.0
  %1535 = vmatprep.subr.mxu0 0.0
  %1536 = vmatpush1.msra.mxu0 0.0
  %1537 = vmatprep.subr.mxu0 0.0
  %1538 = vmatpush1.msra.mxu0 0.0
  %1539 = vmatprep.subr.mxu0 0.0
  %1540 = vmatpush1.msra.mxu0 0.0
  %1541 = vmatprep.subr.mxu0 0.0
  %1542 = vmatpush1.msra.mxu0 0.0
  %1543 = vmatprep.subr.mxu0 0.0
  %1544 = vmatpush1.msra.mxu0 0.0
  %1545 = vmatprep.subr.mxu0 0.0
  %1546 = vmatpush1.msra.mxu0 0.0
  %1547 = vmatprep.mubr.f32.mxu0 0.0
  %v1548 = vand.u32 %v1067, 4294901760
  %1549 = vmatmul.mubr.f32.gmra.mrb[0].mxu0 %v1548
  %v1550 = vpop.f32.mrb[0].mxu0
  %v1551 = vadd.f32 %v1476, %v1550
  %v1552 = vpop.f32.mrb[0].mxu0
  %1553 = vdwg.mxu0
  %v1554 = vmax.f32 %v1551, 0.0
  %v1556 = vsel %vm1055, %v48, 0
  %v1559 = vsel %vm1055, %v49, 0
  %v1562 = vsel %vm1055, %v50, 0
  %v1565 = vsel %vm1055, %v51, 0
  %vm1567 = vcmask 1041408
  %v1569 = vsel %vm1567, %v1554, 0
  %1571 = vmatprep.subr.mxu0 0.0
  %v1572 = vand.u32 %v1569, 4294901760
  %1573 = vmatpush1.msra.mxu0 %v1572
  %1574 = vmatprep.subr.mxu0 0.0
  %1575 = vmatpush1.msra.mxu0 0.0
  %1576 = vmatprep.subr.mxu0 0.0
  %1577 = vmatpush1.msra.mxu0 0.0
  %1578 = vmatprep.subr.mxu0 0.0
  %1579 = vmatpush1.msra.mxu0 0.0
  %1580 = vmatprep.subr.mxu0 0.0
  %1581 = vmatpush1.msra.mxu0 0.0
  %1582 = vmatprep.subr.mxu0 0.0
  %1583 = vmatpush1.msra.mxu0 0.0
  %1584 = vmatprep.subr.mxu0 0.0
  %1585 = vmatpush1.msra.mxu0 0.0
  %1586 = vmatprep.subr.mxu0 0.0
  %1587 = vmatpush1.msra.mxu0 0.0
  %1588 = vmatprep.subr.mxu0 0.0
  %1589 = vmatpush1.msra.mxu0 0.0
  %1590 = vmatprep.subr.mxu0 0.0
  %1591 = vmatpush1.msra.mxu0 0.0
  %1592 = vmatprep.subr.mxu0 0.0
  %1593 = vmatpush1.msra.mxu0 0.0
  %1594 = vmatprep.subr.mxu0 0.0
  %1595 = vmatpush1.msra.mxu0 0.0
  %1596 = vmatprep.subr.mxu0 0.0
  %1597 = vmatpush1.msra.mxu0 0.0
  %1598 = vmatprep.subr.mxu0 0.0
  %1599 = vmatpush1.msra.mxu0 0.0
  %1600 = vmatprep.subr.mxu0 0.0
  %1601 = vmatpush1.msra.mxu0 0.0
  %1602 = vmatprep.subr.mxu0 0.0
  %1603 = vmatpush1.msra.mxu0 0.0
  %1604 = vmatprep.subr.mxu0 0.0
  %1605 = vmatpush1.msra.mxu0 0.0
  %1606 = vmatprep.subr.mxu0 0.0
  %1607 = vmatpush1.msra.mxu0 0.0
  %1608 = vmatprep.subr.mxu0 0.0
  %1609 = vmatpush1.msra.mxu0 0.0
  %1610 = vmatprep.subr.mxu0 0.0
  %1611 = vmatpush1.msra.mxu0 0.0
  %1612 = vmatprep.subr.mxu0 0.0
  %1613 = vmatpush1.msra.mxu0 0.0
  %1614 = vmatprep.subr.mxu0 0.0
  %1615 = vmatpush1.msra.mxu0 0.0
  %1616 = vmatprep.subr.mxu0 0.0
  %1617 = vmatpush1.msra.mxu0 0.0
  %1618 = vmatprep.subr.mxu0 0.0
  %1619 = vmatpush1.msra.mxu0 0.0
  %1620 = vmatprep.subr.mxu0 0.0
  %1621 = vmatpush1.msra.mxu0 0.0
  %1622 = vmatprep.subr.mxu0 0.0
  %1623 = vmatpush1.msra.mxu0 0.0
  %1624 = vmatprep.subr.mxu0 0.0
  %1625 = vmatpush1.msra.mxu0 0.0
  %1626 = vmatprep.subr.mxu0 0.0
  %1627 = vmatpush1.msra.mxu0 0.0
  %1628 = vmatprep.subr.mxu0 0.0
  %1629 = vmatpush1.msra.mxu0 0.0
  %1630 = vmatprep.subr.mxu0 0.0
  %1631 = vmatpush1.msra.mxu0 0.0
  %1632 = vmatprep.subr.mxu0 0.0
  %1633 = vmatpush1.msra.mxu0 0.0
  %1634 = vmatprep.subr.mxu0 0.0
  %1635 = vmatpush1.msra.mxu0 0.0
  %1636 = vmatprep.mubr.f32.mxu0 0.0
  %v1637 = vand.u32 %v1556, 4294901760
  %v1638 = vsub.f32 %v1556, %v1637
  %v1639 = vand.u32 %v1638, 4294901760
  %v1640 = vsub.f32 %v1638, %v1639
  %v1641 = vand.u32 %v1640, 4294901760
  %1642 = vmatmul.mubr.f32.gmra.mrb[0].mxu0 %v1641
  %v1643 = vpop.f32.mrb[0].mxu0
  %v1644 = vadd.f32 0.0, %v1643
  %v1645 = vpop.f32.mrb[0].mxu0
  %1646 = vmatprep.mubr.f32.mxu0 0.0
  %v1647 = vand.u32 %v1559, 4294901760
  %v1648 = vsub.f32 %v1559, %v1647
  %v1649 = vand.u32 %v1648, 4294901760
  %v1650 = vsub.f32 %v1648, %v1649
  %v1651 = vand.u32 %v1650, 4294901760
  %1652 = vmatmul.mubr.f32.gmra.mrb[0].mxu0 %v1651
  %v1653 = vpop.f32.mrb[0].mxu0
  %v1654 = vadd.f32 0.0, %v1653
  %v1655 = vpop.f32.mrb[0].mxu0
  %1656 = vmatprep.mubr.f32.mxu0 0.0
  %v1657 = vand.u32 %v1562, 4294901760
  %v1658 = vsub.f32 %v1562, %v1657
  %v1659 = vand.u32 %v1658, 4294901760
  %v1660 = vsub.f32 %v1658, %v1659
  %v1661 = vand.u32 %v1660, 4294901760
  %1662 = vmatmul.mubr.f32.gmra.mrb[0].mxu0 %v1661
  %v1663 = vpop.f32.mrb[0].mxu0
  %v1664 = vadd.f32 0.0, %v1663
  %v1665 = vpop.f32.mrb[0].mxu0
  %1666 = vmatprep.mubr.f32.mxu0 0.0
  %v1667 = vand.u32 %v1565, 4294901760
  %v1668 = vsub.f32 %v1565, %v1667
  %v1669 = vand.u32 %v1668, 4294901760
  %v1670 = vsub.f32 %v1668, %v1669
  %v1671 = vand.u32 %v1670, 4294901760
  %1672 = vmatmul.mubr.f32.gmra.mrb[0].mxu0 %v1671
  %v1673 = vpop.f32.mrb[0].mxu0
  %v1674 = vadd.f32 0.0, %v1673
  %v1675 = vpop.f32.mrb[0].mxu0
  %1676 = vdwg.mxu0
  %1677 = vmatprep.subr.mxu0 0.0
  %v1678 = vand.u32 %v1569, 4294901760
  %v1679 = vsub.f32 %v1569, %v1678
  %v1680 = vand.u32 %v1679, 4294901760
  %v1681 = vsub.f32 %v1679, %v1680
  %v1682 = vand.u32 %v1681, 4294901760
  %1683 = vmatpush1.msra.mxu0 %v1682
  %1684 = vmatprep.subr.mxu0 0.0
  %1685 = vmatpush1.msra.mxu0 0.0
  %1686 = vmatprep.subr.mxu0 0.0
  %1687 = vmatpush1.msra.mxu0 0.0
  %1688 = vmatprep.subr.mxu0 0.0
  %1689 = vmatpush1.msra.mxu0 0.0
  %1690 = vmatprep.subr.mxu0 0.0
  %1691 = vmatpush1.msra.mxu0 0.0
  %1692 = vmatprep.subr.mxu0 0.0
  %1693 = vmatpush1.msra.mxu0 0.0
  %1694 = vmatprep.subr.mxu0 0.0
  %1695 = vmatpush1.msra.mxu0 0.0
  %1696 = vmatprep.subr.mxu0 0.0
  %1697 = vmatpush1.msra.mxu0 0.0
  %1698 = vmatprep.subr.mxu0 0.0
  %1699 = vmatpush1.msra.mxu0 0.0
  %1700 = vmatprep.subr.mxu0 0.0
  %1701 = vmatpush1.msra.mxu0 0.0
  %1702 = vmatprep.subr.mxu0 0.0
  %1703 = vmatpush1.msra.mxu0 0.0
  %1704 = vmatprep.subr.mxu0 0.0
  %1705 = vmatpush1.msra.mxu0 0.0
  %1706 = vmatprep.subr.mxu0 0.0
  %1707 = vmatpush1.msra.mxu0 0.0
  %1708 = vmatprep.subr.mxu0 0.0
  %1709 = vmatpush1.msra.mxu0 0.0
  %1710 = vmatprep.subr.mxu0 0.0
  %1711 = vmatpush1.msra.mxu0 0.0
  %1712 = vmatprep.subr.mxu0 0.0
  %1713 = vmatpush1.msra.mxu0 0.0
  %1714 = vmatprep.subr.mxu0 0.0
  %1715 = vmatpush1.msra.mxu0 0.0
  %1716 = vmatprep.subr.mxu0 0.0
  %1717 = vmatpush1.msra.mxu0 0.0
  %1718 = vmatprep.subr.mxu0 0.0
  %1719 = vmatpush1.msra.mxu0 0.0
  %1720 = vmatprep.subr.mxu0 0.0
  %1721 = vmatpush1.msra.mxu0 0.0
  %1722 = vmatprep.subr.mxu0 0.0
  %1723 = vmatpush1.msra.mxu0 0.0
  %1724 = vmatprep.subr.mxu0 0.0
  %1725 = vmatpush1.msra.mxu0 0.0
  %1726 = vmatprep.subr.mxu0 0.0
  %1727 = vmatpush1.msra.mxu0 0.0
  %1728 = vmatprep.subr.mxu0 0.0
  %1729 = vmatpush1.msra.mxu0 0.0
  %1730 = vmatprep.subr.mxu0 0.0
  %1731 = vmatpush1.msra.mxu0 0.0
  %1732 = vmatprep.subr.mxu0 0.0
  %1733 = vmatpush1.msra.mxu0 0.0
  %1734 = vmatprep.subr.mxu0 0.0
  %1735 = vmatpush1.msra.mxu0 0.0
  %1736 = vmatprep.subr.mxu0 0.0
  %1737 = vmatpush1.msra.mxu0 0.0
  %1738 = vmatprep.subr.mxu0 0.0
  %1739 = vmatpush1.msra.mxu0 0.0
  %1740 = vmatprep.subr.mxu0 0.0
  %1741 = vmatpush1.msra.mxu0 0.0
  %1742 = vmatprep.subr.mxu0 0.0
  %1743 = vmatpush1.msra.mxu0 0.0
  %1744 = vmatprep.subr.mxu0 0.0
  %1745 = vmatpush1.msra.mxu0 0.0
  %1746 = vmatprep.mubr.f32.mxu0 0.0
  %v1747 = vand.u32 %v1556, 4294901760
  %1748 = vmatmul.mubr.f32.gmra.mrb[0].mxu0 %v1747
  %v1749 = vpop.f32.mrb[0].mxu0
  %v1750 = vadd.f32 %v1644, %v1749
  %v1751 = vpop.f32.mrb[0].mxu0
  %1752 = vmatprep.mubr.f32.mxu0 0.0
  %v1753 = vand.u32 %v1559, 4294901760
  %1754 = vmatmul.mubr.f32.gmra.mrb[0].mxu0 %v1753
  %v1755 = vpop.f32.mrb[0].mxu0
  %v1756 = vadd.f32 %v1654, %v1755
  %v1757 = vpop.f32.mrb[0].mxu0
  %1758 = vmatprep.mubr.f32.mxu0 0.0
  %v1759 = vand.u32 %v1562, 4294901760
  %1760 = vmatmul.mubr.f32.gmra.mrb[0].mxu0 %v1759
  %v1761 = vpop.f32.mrb[0].mxu0
  %v1762 = vadd.f32 %v1664, %v1761
  %v1763 = vpop.f32.mrb[0].mxu0
  %1764 = vmatprep.mubr.f32.mxu0 0.0
  %v1765 = vand.u32 %v1565, 4294901760
  %1766 = vmatmul.mubr.f32.gmra.mrb[0].mxu0 %v1765
  %v1767 = vpop.f32.mrb[0].mxu0
  %v1768 = vadd.f32 %v1674, %v1767
  %v1769 = vpop.f32.mrb[0].mxu0
  %1770 = vdwg.mxu0
  %1771 = vmatprep.subr.mxu0 0.0
  %v1772 = vand.u32 %v1569, 4294901760
  %v1773 = vsub.f32 %v1569, %v1772
  %1774 = vmatpush1.msra.mxu0 %v1773
  %1775 = vmatprep.subr.mxu0 0.0
  %1776 = vmatpush1.msra.mxu0 0.0
  %1777 = vmatprep.subr.mxu0 0.0
  %1778 = vmatpush1.msra.mxu0 0.0
  %1779 = vmatprep.subr.mxu0 0.0
  %1780 = vmatpush1.msra.mxu0 0.0
  %1781 = vmatprep.subr.mxu0 0.0
  %1782 = vmatpush1.msra.mxu0 0.0
  %1783 = vmatprep.subr.mxu0 0.0
  %1784 = vmatpush1.msra.mxu0 0.0
  %1785 = vmatprep.subr.mxu0 0.0
  %1786 = vmatpush1.msra.mxu0 0.0
  %1787 = vmatprep.subr.mxu0 0.0
  %1788 = vmatpush1.msra.mxu0 0.0
  %1789 = vmatprep.subr.mxu0 0.0
  %1790 = vmatpush1.msra.mxu0 0.0
  %1791 = vmatprep.subr.mxu0 0.0
  %1792 = vmatpush1.msra.mxu0 0.0
  %1793 = vmatprep.subr.mxu0 0.0
  %1794 = vmatpush1.msra.mxu0 0.0
  %1795 = vmatprep.subr.mxu0 0.0
  %1796 = vmatpush1.msra.mxu0 0.0
  %1797 = vmatprep.subr.mxu0 0.0
  %1798 = vmatpush1.msra.mxu0 0.0
  %1799 = vmatprep.subr.mxu0 0.0
  %1800 = vmatpush1.msra.mxu0 0.0
  %1801 = vmatprep.subr.mxu0 0.0
  %1802 = vmatpush1.msra.mxu0 0.0
  %1803 = vmatprep.subr.mxu0 0.0
  %1804 = vmatpush1.msra.mxu0 0.0
  %1805 = vmatprep.subr.mxu0 0.0
  %1806 = vmatpush1.msra.mxu0 0.0
  %1807 = vmatprep.subr.mxu0 0.0
  %1808 = vmatpush1.msra.mxu0 0.0
  %1809 = vmatprep.subr.mxu0 0.0
  %1810 = vmatpush1.msra.mxu0 0.0
  %1811 = vmatprep.subr.mxu0 0.0
  %1812 = vmatpush1.msra.mxu0 0.0
  %1813 = vmatprep.subr.mxu0 0.0
  %1814 = vmatpush1.msra.mxu0 0.0
  %1815 = vmatprep.subr.mxu0 0.0
  %1816 = vmatpush1.msra.mxu0 0.0
  %1817 = vmatprep.subr.mxu0 0.0
  %1818 = vmatpush1.msra.mxu0 0.0
  %1819 = vmatprep.subr.mxu0 0.0
  %1820 = vmatpush1.msra.mxu0 0.0
  %1821 = vmatprep.subr.mxu0 0.0
  %1822 = vmatpush1.msra.mxu0 0.0
  %1823 = vmatprep.subr.mxu0 0.0
  %1824 = vmatpush1.msra.mxu0 0.0
  %1825 = vmatprep.subr.mxu0 0.0
  %1826 = vmatpush1.msra.mxu0 0.0
  %1827 = vmatprep.subr.mxu0 0.0
  %1828 = vmatpush1.msra.mxu0 0.0
  %1829 = vmatprep.subr.mxu0 0.0
  %1830 = vmatpush1.msra.mxu0 0.0
  %1831 = vmatprep.subr.mxu0 0.0
  %1832 = vmatpush1.msra.mxu0 0.0
  %1833 = vmatprep.subr.mxu0 0.0
  %1834 = vmatpush1.msra.mxu0 0.0
  %1835 = vmatprep.subr.mxu0 0.0
  %1836 = vmatpush1.msra.mxu0 0.0
  %1837 = vmatprep.mubr.f32.mxu0 0.0
  %v1838 = vand.u32 %v1556, 4294901760
  %v1839 = vsub.f32 %v1556, %v1838
  %1840 = vmatmul.mubr.f32.gmra.mrb[0].mxu0 %v1839
  %v1841 = vpop.f32.mrb[0].mxu0
  %v1842 = vadd.f32 %v1750, %v1841
  %v1843 = vpop.f32.mrb[0].mxu0
  %1844 = vmatprep.mubr.f32.mxu0 0.0
  %v1845 = vand.u32 %v1559, 4294901760
  %v1846 = vsub.f32 %v1559, %v1845
  %1847 = vmatmul.mubr.f32.gmra.mrb[0].mxu0 %v1846
  %v1848 = vpop.f32.mrb[0].mxu0
  %v1849 = vadd.f32 %v1756, %v1848
  %v1850 = vpop.f32.mrb[0].mxu0
  %1851 = vmatprep.mubr.f32.mxu0 0.0
  %v1852 = vand.u32 %v1562, 4294901760
  %v1853 = vsub.f32 %v1562, %v1852
  %1854 = vmatmul.mubr.f32.gmra.mrb[0].mxu0 %v1853
  %v1855 = vpop.f32.mrb[0].mxu0
  %v1856 = vadd.f32 %v1762, %v1855
  %v1857 = vpop.f32.mrb[0].mxu0
  %1858 = vmatprep.mubr.f32.mxu0 0.0
  %v1859 = vand.u32 %v1565, 4294901760
  %v1860 = vsub.f32 %v1565, %v1859
  %1861 = vmatmul.mubr.f32.gmra.mrb[0].mxu0 %v1860
  %v1862 = vpop.f32.mrb[0].mxu0
  %v1863 = vadd.f32 %v1768, %v1862
  %v1864 = vpop.f32.mrb[0].mxu0
  %1865 = vdwg.mxu0
  %1866 = vmatprep.subr.mxu0 0.0
  %v1867 = vand.u32 %v1569, 4294901760
  %1868 = vmatpush1.msra.mxu0 %v1867
  %1869 = vmatprep.subr.mxu0 0.0
  %1870 = vmatpush1.msra.mxu0 0.0
  %1871 = vmatprep.subr.mxu0 0.0
  %1872 = vmatpush1.msra.mxu0 0.0
  %1873 = vmatprep.subr.mxu0 0.0
  %1874 = vmatpush1.msra.mxu0 0.0
  %1875 = vmatprep.subr.mxu0 0.0
  %1876 = vmatpush1.msra.mxu0 0.0
  %1877 = vmatprep.subr.mxu0 0.0
  %1878 = vmatpush1.msra.mxu0 0.0
  %1879 = vmatprep.subr.mxu0 0.0
  %1880 = vmatpush1.msra.mxu0 0.0
  %1881 = vmatprep.subr.mxu0 0.0
  %1882 = vmatpush1.msra.mxu0 0.0
  %1883 = vmatprep.subr.mxu0 0.0
  %1884 = vmatpush1.msra.mxu0 0.0
  %1885 = vmatprep.subr.mxu0 0.0
  %1886 = vmatpush1.msra.mxu0 0.0
  %1887 = vmatprep.subr.mxu0 0.0
  %1888 = vmatpush1.msra.mxu0 0.0
  %1889 = vmatprep.subr.mxu0 0.0
  %1890 = vmatpush1.msra.mxu0 0.0
  %1891 = vmatprep.subr.mxu0 0.0
  %1892 = vmatpush1.msra.mxu0 0.0
  %1893 = vmatprep.subr.mxu0 0.0
  %1894 = vmatpush1.msra.mxu0 0.0
  %1895 = vmatprep.subr.mxu0 0.0
  %1896 = vmatpush1.msra.mxu0 0.0
  %1897 = vmatprep.subr.mxu0 0.0
  %1898 = vmatpush1.msra.mxu0 0.0
  %1899 = vmatprep.subr.mxu0 0.0
  %1900 = vmatpush1.msra.mxu0 0.0
  %1901 = vmatprep.subr.mxu0 0.0
  %1902 = vmatpush1.msra.mxu0 0.0
  %1903 = vmatprep.subr.mxu0 0.0
  %1904 = vmatpush1.msra.mxu0 0.0
  %1905 = vmatprep.subr.mxu0 0.0
  %1906 = vmatpush1.msra.mxu0 0.0
  %1907 = vmatprep.subr.mxu0 0.0
  %1908 = vmatpush1.msra.mxu0 0.0
  %1909 = vmatprep.subr.mxu0 0.0
  %1910 = vmatpush1.msra.mxu0 0.0
  %1911 = vmatprep.subr.mxu0 0.0
  %1912 = vmatpush1.msra.mxu0 0.0
  %1913 = vmatprep.subr.mxu0 0.0
  %1914 = vmatpush1.msra.mxu0 0.0
  %1915 = vmatprep.subr.mxu0 0.0
  %1916 = vmatpush1.msra.mxu0 0.0
  %1917 = vmatprep.subr.mxu0 0.0
  %1918 = vmatpush1.msra.mxu0 0.0
  %1919 = vmatprep.subr.mxu0 0.0
  %1920 = vmatpush1.msra.mxu0 0.0
  %1921 = vmatprep.subr.mxu0 0.0
  %1922 = vmatpush1.msra.mxu0 0.0
  %1923 = vmatprep.subr.mxu0 0.0
  %1924 = vmatpush1.msra.mxu0 0.0
  %1925 = vmatprep.subr.mxu0 0.0
  %1926 = vmatpush1.msra.mxu0 0.0
  %1927 = vmatprep.subr.mxu0 0.0
  %1928 = vmatpush1.msra.mxu0 0.0
  %1929 = vmatprep.subr.mxu0 0.0
  %1930 = vmatpush1.msra.mxu0 0.0
  %1931 = vmatprep.mubr.f32.mxu0 0.0
  %v1932 = vand.u32 %v1556, 4294901760
  %v1933 = vsub.f32 %v1556, %v1932
  %v1934 = vand.u32 %v1933, 4294901760
  %1935 = vmatmul.mubr.f32.gmra.mrb[0].mxu0 %v1934
  %v1936 = vpop.f32.mrb[0].mxu0
  %v1937 = vadd.f32 %v1842, %v1936
  %v1938 = vpop.f32.mrb[0].mxu0
  %1939 = vmatprep.mubr.f32.mxu0 0.0
  %v1940 = vand.u32 %v1559, 4294901760
  %v1941 = vsub.f32 %v1559, %v1940
  %v1942 = vand.u32 %v1941, 4294901760
  %1943 = vmatmul.mubr.f32.gmra.mrb[0].mxu0 %v1942
  %v1944 = vpop.f32.mrb[0].mxu0
  %v1945 = vadd.f32 %v1849, %v1944
  %v1946 = vpop.f32.mrb[0].mxu0
  %1947 = vmatprep.mubr.f32.mxu0 0.0
  %v1948 = vand.u32 %v1562, 4294901760
  %v1949 = vsub.f32 %v1562, %v1948
  %v1950 = vand.u32 %v1949, 4294901760
  %1951 = vmatmul.mubr.f32.gmra.mrb[0].mxu0 %v1950
  %v1952 = vpop.f32.mrb[0].mxu0
  %v1953 = vadd.f32 %v1856, %v1952
  %v1954 = vpop.f32.mrb[0].mxu0
  %1955 = vmatprep.mubr.f32.mxu0 0.0
  %v1956 = vand.u32 %v1565, 4294901760
  %v1957 = vsub.f32 %v1565, %v1956
  %v1958 = vand.u32 %v1957, 4294901760
  %1959 = vmatmul.mubr.f32.gmra.mrb[0].mxu0 %v1958
  %v1960 = vpop.f32.mrb[0].mxu0
  %v1961 = vadd.f32 %v1863, %v1960
  %v1962 = vpop.f32.mrb[0].mxu0
  %1963 = vdwg.mxu0
  %1964 = vmatprep.subr.mxu0 0.0
  %v1965 = vand.u32 %v1569, 4294901760
  %v1966 = vsub.f32 %v1569, %v1965
  %v1967 = vand.u32 %v1966, 4294901760
  %1968 = vmatpush1.msra.mxu0 %v1967
  %1969 = vmatprep.subr.mxu0 0.0
  %1970 = vmatpush1.msra.mxu0 0.0
  %1971 = vmatprep.subr.mxu0 0.0
  %1972 = vmatpush1.msra.mxu0 0.0
  %1973 = vmatprep.subr.mxu0 0.0
  %1974 = vmatpush1.msra.mxu0 0.0
  %1975 = vmatprep.subr.mxu0 0.0
  %1976 = vmatpush1.msra.mxu0 0.0
  %1977 = vmatprep.subr.mxu0 0.0
  %1978 = vmatpush1.msra.mxu0 0.0
  %1979 = vmatprep.subr.mxu0 0.0
  %1980 = vmatpush1.msra.mxu0 0.0
  %1981 = vmatprep.subr.mxu0 0.0
  %1982 = vmatpush1.msra.mxu0 0.0
  %1983 = vmatprep.subr.mxu0 0.0
  %1984 = vmatpush1.msra.mxu0 0.0
  %1985 = vmatprep.subr.mxu0 0.0
  %1986 = vmatpush1.msra.mxu0 0.0
  %1987 = vmatprep.subr.mxu0 0.0
  %1988 = vmatpush1.msra.mxu0 0.0
  %1989 = vmatprep.subr.mxu0 0.0
  %1990 = vmatpush1.msra.mxu0 0.0
  %1991 = vmatprep.subr.mxu0 0.0
  %1992 = vmatpush1.msra.mxu0 0.0
  %1993 = vmatprep.subr.mxu0 0.0
  %1994 = vmatpush1.msra.mxu0 0.0
  %1995 = vmatprep.subr.mxu0 0.0
  %1996 = vmatpush1.msra.mxu0 0.0
  %1997 = vmatprep.subr.mxu0 0.0
  %1998 = vmatpush1.msra.mxu0 0.0
  %1999 = vmatprep.subr.mxu0 0.0
  %2000 = vmatpush1.msra.mxu0 0.0
  %2001 = vmatprep.subr.mxu0 0.0
  %2002 = vmatpush1.msra.mxu0 0.0
  %2003 = vmatprep.subr.mxu0 0.0
  %2004 = vmatpush1.msra.mxu0 0.0
  %2005 = vmatprep.subr.mxu0 0.0
  %2006 = vmatpush1.msra.mxu0 0.0
  %2007 = vmatprep.subr.mxu0 0.0
  %2008 = vmatpush1.msra.mxu0 0.0
  %2009 = vmatprep.subr.mxu0 0.0
  %2010 = vmatpush1.msra.mxu0 0.0
  %2011 = vmatprep.subr.mxu0 0.0
  %2012 = vmatpush1.msra.mxu0 0.0
  %2013 = vmatprep.subr.mxu0 0.0
  %2014 = vmatpush1.msra.mxu0 0.0
  %2015 = vmatprep.subr.mxu0 0.0
  %2016 = vmatpush1.msra.mxu0 0.0
  %2017 = vmatprep.subr.mxu0 0.0
  %2018 = vmatpush1.msra.mxu0 0.0
  %2019 = vmatprep.subr.mxu0 0.0
  %2020 = vmatpush1.msra.mxu0 0.0
  %2021 = vmatprep.subr.mxu0 0.0
  %2022 = vmatpush1.msra.mxu0 0.0
  %2023 = vmatprep.subr.mxu0 0.0
  %2024 = vmatpush1.msra.mxu0 0.0
  %2025 = vmatprep.subr.mxu0 0.0
  %2026 = vmatpush1.msra.mxu0 0.0
  %2027 = vmatprep.subr.mxu0 0.0
  %2028 = vmatpush1.msra.mxu0 0.0
  %2029 = vmatprep.subr.mxu0 0.0
  %2030 = vmatpush1.msra.mxu0 0.0
  %2031 = vmatprep.mubr.f32.mxu0 0.0
  %v2032 = vand.u32 %v1556, 4294901760
  %2033 = vmatmul.mubr.f32.gmra.mrb[0].mxu0 %v2032
  %v2034 = vpop.f32.mrb[0].mxu0
  %v2035 = vadd.f32 %v1937, %v2034
  %v2036 = vpop.f32.mrb[0].mxu0
  %2037 = vmatprep.mubr.f32.mxu0 0.0
  %v2038 = vand.u32 %v1559, 4294901760
  %2039 = vmatmul.mubr.f32.gmra.mrb[0].mxu0 %v2038
  %v2040 = vpop.f32.mrb[0].mxu0
  %v2041 = vadd.f32 %v1945, %v2040
  %v2042 = vpop.f32.mrb[0].mxu0
  %2043 = vmatprep.mubr.f32.mxu0 0.0
  %v2044 = vand.u32 %v1562, 4294901760
  %2045 = vmatmul.mubr.f32.gmra.mrb[0].mxu0 %v2044
  %v2046 = vpop.f32.mrb[0].mxu0
  %v2047 = vadd.f32 %v1953, %v2046
  %v2048 = vpop.f32.mrb[0].mxu0
  %2049 = vmatprep.mubr.f32.mxu0 0.0
  %v2050 = vand.u32 %v1565, 4294901760
  %2051 = vmatmul.mubr.f32.gmra.mrb[0].mxu0 %v2050
  %v2052 = vpop.f32.mrb[0].mxu0
  %v2053 = vadd.f32 %v1961, %v2052
  %v2054 = vpop.f32.mrb[0].mxu0
  %2055 = vdwg.mxu0
  %2056 = vmatprep.subr.mxu0 0.0
  %v2057 = vand.u32 %v1569, 4294901760
  %2058 = vmatpush1.msra.mxu0 %v2057
  %2059 = vmatprep.subr.mxu0 0.0
  %2060 = vmatpush1.msra.mxu0 0.0
  %2061 = vmatprep.subr.mxu0 0.0
  %2062 = vmatpush1.msra.mxu0 0.0
  %2063 = vmatprep.subr.mxu0 0.0
  %2064 = vmatpush1.msra.mxu0 0.0
  %2065 = vmatprep.subr.mxu0 0.0
  %2066 = vmatpush1.msra.mxu0 0.0
  %2067 = vmatprep.subr.mxu0 0.0
  %2068 = vmatpush1.msra.mxu0 0.0
  %2069 = vmatprep.subr.mxu0 0.0
  %2070 = vmatpush1.msra.mxu0 0.0
  %2071 = vmatprep.subr.mxu0 0.0
  %2072 = vmatpush1.msra.mxu0 0.0
  %2073 = vmatprep.subr.mxu0 0.0
  %2074 = vmatpush1.msra.mxu0 0.0
  %2075 = vmatprep.subr.mxu0 0.0
  %2076 = vmatpush1.msra.mxu0 0.0
  %2077 = vmatprep.subr.mxu0 0.0
  %2078 = vmatpush1.msra.mxu0 0.0
  %2079 = vmatprep.subr.mxu0 0.0
  %2080 = vmatpush1.msra.mxu0 0.0
  %2081 = vmatprep.subr.mxu0 0.0
  %2082 = vmatpush1.msra.mxu0 0.0
  %2083 = vmatprep.subr.mxu0 0.0
  %2084 = vmatpush1.msra.mxu0 0.0
  %2085 = vmatprep.subr.mxu0 0.0
  %2086 = vmatpush1.msra.mxu0 0.0
  %2087 = vmatprep.subr.mxu0 0.0
  %2088 = vmatpush1.msra.mxu0 0.0
  %2089 = vmatprep.subr.mxu0 0.0
  %2090 = vmatpush1.msra.mxu0 0.0
  %2091 = vmatprep.subr.mxu0 0.0
  %2092 = vmatpush1.msra.mxu0 0.0
  %2093 = vmatprep.subr.mxu0 0.0
  %2094 = vmatpush1.msra.mxu0 0.0
  %2095 = vmatprep.subr.mxu0 0.0
  %2096 = vmatpush1.msra.mxu0 0.0
  %2097 = vmatprep.subr.mxu0 0.0
  %2098 = vmatpush1.msra.mxu0 0.0
  %2099 = vmatprep.subr.mxu0 0.0
  %2100 = vmatpush1.msra.mxu0 0.0
  %2101 = vmatprep.subr.mxu0 0.0
  %2102 = vmatpush1.msra.mxu0 0.0
  %2103 = vmatprep.subr.mxu0 0.0
  %2104 = vmatpush1.msra.mxu0 0.0
  %2105 = vmatprep.subr.mxu0 0.0
  %2106 = vmatpush1.msra.mxu0 0.0
  %2107 = vmatprep.subr.mxu0 0.0
  %2108 = vmatpush1.msra.mxu0 0.0
  %2109 = vmatprep.subr.mxu0 0.0
  %2110 = vmatpush1.msra.mxu0 0.0
  %2111 = vmatprep.subr.mxu0 0.0
  %2112 = vmatpush1.msra.mxu0 0.0
  %2113 = vmatprep.subr.mxu0 0.0
  %2114 = vmatpush1.msra.mxu0 0.0
  %2115 = vmatprep.subr.mxu0 0.0
  %2116 = vmatpush1.msra.mxu0 0.0
  %2117 = vmatprep.subr.mxu0 0.0
  %2118 = vmatpush1.msra.mxu0 0.0
  %2119 = vmatprep.subr.mxu0 0.0
  %2120 = vmatpush1.msra.mxu0 0.0
  %2121 = vmatprep.mubr.f32.mxu0 0.0
  %v2122 = vand.u32 %v1556, 4294901760
  %2123 = vmatmul.mubr.f32.gmra.mrb[0].mxu0 %v2122
  %v2124 = vpop.f32.mrb[0].mxu0
  %v2125 = vadd.f32 %v2035, %v2124
  %v2126 = vpop.f32.mrb[0].mxu0
  %2127 = vmatprep.mubr.f32.mxu0 0.0
  %v2128 = vand.u32 %v1559, 4294901760
  %2129 = vmatmul.mubr.f32.gmra.mrb[0].mxu0 %v2128
  %v2130 = vpop.f32.mrb[0].mxu0
  %v2131 = vadd.f32 %v2041, %v2130
  %v2132 = vpop.f32.mrb[0].mxu0
  %2133 = vmatprep.mubr.f32.mxu0 0.0
  %v2134 = vand.u32 %v1562, 4294901760
  %2135 = vmatmul.mubr.f32.gmra.mrb[0].mxu0 %v2134
  %v2136 = vpop.f32.mrb[0].mxu0
  %v2137 = vadd.f32 %v2047, %v2136
  %v2138 = vpop.f32.mrb[0].mxu0
  %2139 = vmatprep.mubr.f32.mxu0 0.0
  %v2140 = vand.u32 %v1565, 4294901760
  %2141 = vmatmul.mubr.f32.gmra.mrb[0].mxu0 %v2140
  %v2142 = vpop.f32.mrb[0].mxu0
  %v2143 = vadd.f32 %v2053, %v2142
  %v2144 = vpop.f32.mrb[0].mxu0
  %2145 = vdwg.mxu0
  %2150 = vrot.lane.b32.xlu0 %v2125, 126
  %v2151 = vpop.permute.xlu0 %2150
  %2152 = vrot.lane.b32.xlu0 %v2131, 126
  %v2153 = vpop.permute.xlu0 %2152
  %2154 = vrot.lane.b32.xlu0 %v2137, 126
  %v2155 = vpop.permute.xlu0 %2154
  %2156 = vrot.lane.b32.xlu0 %v2143, 126
  %v2157 = vpop.permute.xlu0 %2156
  %v2162 = vadd.f32 %v2125, %v2151
  %v2163 = vadd.f32 %v2131, %v2153
  %v2164 = vadd.f32 %v2137, %v2155
  %v2165 = vadd.f32 %v2143, %v2157
  %v2166 = vsub.f32 0.0, %v2162
  %v2167 = vsub.f32 0.0, %v2163
  %v2168 = vsub.f32 0.0, %v2164
  %v2169 = vsub.f32 0.0, %v2165
  %v2170 = vmul.f32 %v2166, 1.442695
  %v2171 = vpow.pop %v2170
  %v2172 = vmul.f32 %v2167, 1.442695
  %v2173 = vpow.pop %v2172
  %v2174 = vmul.f32 %v2168, 1.442695
  %v2175 = vpow.pop %v2174
  %v2176 = vmul.f32 %v2169, 1.442695
  %v2177 = vpow.pop %v2176
  %v2178 = vadd.f32 %v2171, 1.0
  %v2179 = vadd.f32 %v2173, 1.0
  %v2180 = vadd.f32 %v2175, 1.0
  %v2181 = vadd.f32 %v2177, 1.0
  %v2182 = vrcp.pop %v2178
  %v2183 = vrcp.pop %v2179
  %v2184 = vrcp.pop %v2180
  %v2185 = vrcp.pop %v2181
  %2187 = vset.pattern.permute.xlu0 0
  %2188 = vperm.xlu0 %2187, %v2182
  %v2189 = vpop.permute.xlu0 %2188
  %2192 = vset.pattern.permute.xlu0 0
  %2193 = vperm.xlu0 %2192, %v2183
  %v2194 = vpop.permute.xlu0 %2193
  %2197 = vset.pattern.permute.xlu0 0
  %2198 = vperm.xlu0 %2197, %v2184
  %v2199 = vpop.permute.xlu0 %2198
  %2202 = vset.pattern.permute.xlu0 0
  %2203 = vperm.xlu0 %2202, %v2185
  %v2204 = vpop.permute.xlu0 %2203
  %v2206 = vmul.f32 %v974, %v2189
  %v2207 = vmul.f32 %v975, %v2194
  %v2208 = vmul.f32 %v980, %v2199
  %v2209 = vmul.f32 %v981, %v2204
  %v2210 = vadd.f32 %v2206, %v52
  %v2211 = vadd.f32 %v2207, %v53
  %v2212 = vadd.f32 %v2208, %v54
  %v2213 = vadd.f32 %v2209, %v55
  %2214 = vadd.xlane.f32.xlu0 %v66
  %v2215 = vpop.xlane.xlu0 %2214
  %2216 = vadd.xlane.f32.xlu0 %v67
  %v2217 = vpop.xlane.xlu0 %2216
  %2218 = vadd.xlane.f32.xlu0 %v85
  %v2219 = vpop.xlane.xlu0 %2218
  %2220 = vadd.xlane.f32.xlu0 %v86
  %v2221 = vpop.xlane.xlu0 %2220
  %v2222 = vmul.f32 %v2215, 0.020408163
  %v2223 = vmul.f32 %v2217, 0.020408163
  %v2224 = vmul.f32 %v2219, 0.020408163
  %v2225 = vmul.f32 %v2221, 0.020408163
  %v2226 = vsel %vm56, %v2210, -inf
  %2227 = vmax.xlane.f32.xlu0 %v2226
  %v2228 = vpop.xlane.xlu0 %2227
  %v2229 = vsel %vm56, %v2211, -inf
  %2230 = vmax.xlane.f32.xlu0 %v2229
  %v2231 = vpop.xlane.xlu0 %2230
  %v2232 = vsel %vm56, %v2212, -inf
  %2233 = vmax.xlane.f32.xlu0 %v2232
  %v2234 = vpop.xlane.xlu0 %2233
  %v2235 = vsel %vm56, %v2213, -inf
  %2236 = vmax.xlane.f32.xlu0 %v2235
  %v2237 = vpop.xlane.xlu0 %2236
  %v2238 = vadd.f32 %v2228, %v2222
  %v2239 = vadd.f32 %v2231, %v2223
  %v2240 = vadd.f32 %v2234, %v2224
  %v2241 = vadd.f32 %v2237, %v2225
  %2242 = vset.pattern.permute.xlu0 1
  %2243 = vperm.xlu0 %2242, %v2182
  %v2244 = vpop.permute.xlu0 %2243
  %2246 = vset.pattern.permute.xlu0 1
  %2247 = vperm.xlu0 %2246, %v2183
  %v2248 = vpop.permute.xlu0 %2247
  %2250 = vset.pattern.permute.xlu0 1
  %2251 = vperm.xlu0 %2250, %v2184
  %v2252 = vpop.permute.xlu0 %2251
  %2254 = vset.pattern.permute.xlu0 1
  %2255 = vperm.xlu0 %2254, %v2185
  %v2256 = vpop.permute.xlu0 %2255
  %v2258 = vmul.f32 %v1014, %v2244
  %v2259 = vmul.f32 %v1015, %v2248
  %v2260 = vmul.f32 %v1020, %v2252
  %v2261 = vmul.f32 %v1021, %v2256
  %v2262 = vadd.f32 %v2258, %v113
  %v2263 = vadd.f32 %v2259, %v115
  %v2264 = vadd.f32 %v2260, %v117
  %v2265 = vadd.f32 %v2261, %v119
  %2266 = vadd.xlane.f32.xlu0 %v129
  %v2267 = vpop.xlane.xlu0 %2266
  %2268 = vadd.xlane.f32.xlu0 %v130
  %v2269 = vpop.xlane.xlu0 %2268
  %2270 = vadd.xlane.f32.xlu0 %v148
  %v2271 = vpop.xlane.xlu0 %2270
  %2272 = vadd.xlane.f32.xlu0 %v149
  %v2273 = vpop.xlane.xlu0 %2272
  %v2274 = vmul.f32 %v2267, 0.020408163
  %v2275 = vmul.f32 %v2269, 0.020408163
  %v2276 = vmul.f32 %v2271, 0.020408163
  %v2277 = vmul.f32 %v2273, 0.020408163
  %v2278 = vsel %vm56, %v2262, -inf
  %2279 = vmax.xlane.f32.xlu0 %v2278
  %v2280 = vpop.xlane.xlu0 %2279
  %v2281 = vsel %vm56, %v2263, -inf
  %2282 = vmax.xlane.f32.xlu0 %v2281
  %v2283 = vpop.xlane.xlu0 %2282
  %v2284 = vsel %vm56, %v2264, -inf
  %2285 = vmax.xlane.f32.xlu0 %v2284
  %v2286 = vpop.xlane.xlu0 %2285
  %v2287 = vsel %vm56, %v2265, -inf
  %2288 = vmax.xlane.f32.xlu0 %v2287
  %v2289 = vpop.xlane.xlu0 %2288
  %v2290 = vadd.f32 %v2280, %v2274
  %v2291 = vadd.f32 %v2283, %v2275
  %v2292 = vadd.f32 %v2286, %v2276
  %v2293 = vadd.f32 %v2289, %v2277
  %v2294 = vsel %vm1050, %v2238, %v2290
  %v2295 = vsel %vm1050, %v2239, %v2291
  %v2296 = vsel %vm1050, %v2240, %v2292
  %v2297 = vsel %vm1050, %v2241, %v2293
  %v2298 = vsel %vm1055, %v2294, %v2222
  %v2299 = vsel %vm1055, %v2295, %v2223
  %v2300 = vsel %vm1055, %v2296, %v2224
  %v2301 = vsel %vm1055, %v2297, %v2225
  %v2302 = vsel %vm1060, %v2298, %v2274
  %v2303 = vsel %vm1060, %v2299, %v2275
  %v2304 = vsel %vm1060, %v2300, %v2276
  %v2305 = vsel %vm1060, %v2301, %v2277
  %vm2306 = vcmask 31744
  %v2308 = vsel %vm2306, %v47, 0
  %v2311 = vsel %vm2306, %v2302, 0
  %v2314 = vsel %vm2306, %v2303, 0
  %v2317 = vsel %vm2306, %v2304, 0
  %v2320 = vsel %vm2306, %v2305, 0
  %2322 = vmatprep.subr.mxu0 0.0
  %v2323 = vand.u32 %v2311, 4294901760
  %2324 = vmatpush1.xpose.msra.mxu0 %v2323
  %2325 = vmatprep.subr.mxu0 0.0
  %v2326 = vand.u32 %v2314, 4294901760
  %2327 = vmatpush1.xpose.msra.mxu0 %v2326
  %2328 = vmatprep.subr.mxu0 0.0
  %v2329 = vand.u32 %v2317, 4294901760
  %2330 = vmatpush1.xpose.msra.mxu0 %v2329
  %2331 = vmatprep.subr.mxu0 0.0
  %v2332 = vand.u32 %v2320, 4294901760
  %2333 = vmatpush1.xpose.msra.mxu0 %v2332
  %2334 = vmatprep.subr.mxu0 0.0
  %2335 = vmatpush1.xpose.msra.mxu0 0.0
  %2336 = vmatprep.subr.mxu0 0.0
  %2337 = vmatpush1.xpose.msra.mxu0 0.0
  %2338 = vmatprep.subr.mxu0 0.0
  %2339 = vmatpush1.xpose.msra.mxu0 0.0
  %2340 = vmatprep.subr.mxu0 0.0
  %2341 = vmatpush1.xpose.msra.mxu0 0.0
  %2342 = vmatprep.subr.mxu0 0.0
  %2343 = vmatpush1.xpose.msra.mxu0 0.0
  %2344 = vmatprep.subr.mxu0 0.0
  %2345 = vmatpush1.xpose.msra.mxu0 0.0
  %2346 = vmatprep.subr.mxu0 0.0
  %2347 = vmatpush1.xpose.msra.mxu0 0.0
  %2348 = vmatprep.subr.mxu0 0.0
  %2349 = vmatpush1.xpose.msra.mxu0 0.0
  %2350 = vmatprep.subr.mxu0 0.0
  %2351 = vmatpush1.xpose.msra.mxu0 0.0
  %2352 = vmatprep.subr.mxu0 0.0
  %2353 = vmatpush1.xpose.msra.mxu0 0.0
  %2354 = vmatprep.subr.mxu0 0.0
  %2355 = vmatpush1.xpose.msra.mxu0 0.0
  %2356 = vmatprep.subr.mxu0 0.0
  %2357 = vmatpush1.xpose.msra.mxu0 0.0
  %2358 = vmatprep.subr.mxu0 0.0
  %2359 = vmatpush1.xpose.msra.mxu0 0.0
  %2360 = vmatprep.subr.mxu0 0.0
  %2361 = vmatpush1.xpose.msra.mxu0 0.0
  %2362 = vmatprep.subr.mxu0 0.0
  %2363 = vmatpush1.xpose.msra.mxu0 0.0
  %2364 = vmatprep.subr.mxu0 0.0
  %2365 = vmatpush1.xpose.msra.mxu0 0.0
  %2366 = vmatprep.subr.mxu0 0.0
  %2367 = vmatpush1.xpose.msra.mxu0 0.0
  %2368 = vmatprep.subr.mxu0 0.0
  %2369 = vmatpush1.xpose.msra.mxu0 0.0
  %2370 = vmatprep.subr.mxu0 0.0
  %2371 = vmatpush1.xpose.msra.mxu0 0.0
  %2372 = vmatprep.subr.mxu0 0.0
  %2373 = vmatpush1.xpose.msra.mxu0 0.0
  %2374 = vmatprep.subr.mxu0 0.0
  %2375 = vmatpush1.xpose.msra.mxu0 0.0
  %2376 = vmatprep.subr.mxu0 0.0
  %2377 = vmatpush1.xpose.msra.mxu0 0.0
  %2378 = vmatprep.subr.mxu0 0.0
  %2379 = vmatpush1.xpose.msra.mxu0 0.0
  %2380 = vmatprep.subr.mxu0 0.0
  %2381 = vmatpush1.xpose.msra.mxu0 0.0
  %2382 = vmatprep.subr.mxu0 0.0
  %2383 = vmatpush1.xpose.msra.mxu0 0.0
  %2384 = vmatprep.subr.mxu0 0.0
  %2385 = vmatpush1.xpose.msra.mxu0 0.0
  %2386 = vmatprep.subr.mxu0 0.0
  %2387 = vmatpush1.xpose.msra.mxu0 0.0
  %2388 = vmatprep.subr.mxu0 0.0
  %2389 = vmatpush1.xpose.msra.mxu0 0.0
  %2390 = vmatprep.mubr.f32.mxu0 0.0
  %v2391 = vand.u32 %v2308, 4294901760
  %v2392 = vsub.f32 %v2308, %v2391
  %v2393 = vand.u32 %v2392, 4294901760
  %v2394 = vsub.f32 %v2392, %v2393
  %v2395 = vand.u32 %v2394, 4294901760
  %2396 = vmatmul.mubr.f32.gmra.mrb[0].mxu0 %v2395
  %v2397 = vpop.f32.mrb[0].mxu0
  %v2398 = vadd.f32 0.0, %v2397
  %v2399 = vpop.f32.mrb[0].mxu0
  %2400 = vdwg.mxu0
  %2401 = vmatprep.subr.mxu0 0.0
  %v2402 = vand.u32 %v2311, 4294901760
  %v2403 = vsub.f32 %v2311, %v2402
  %v2404 = vand.u32 %v2403, 4294901760
  %v2405 = vsub.f32 %v2403, %v2404
  %v2406 = vand.u32 %v2405, 4294901760
  %2407 = vmatpush1.xpose.msra.mxu0 %v2406
  %2408 = vmatprep.subr.mxu0 0.0
  %v2409 = vand.u32 %v2314, 4294901760
  %v2410 = vsub.f32 %v2314, %v2409
  %v2411 = vand.u32 %v2410, 4294901760
  %v2412 = vsub.f32 %v2410, %v2411
  %v2413 = vand.u32 %v2412, 4294901760
  %2414 = vmatpush1.xpose.msra.mxu0 %v2413
  %2415 = vmatprep.subr.mxu0 0.0
  %v2416 = vand.u32 %v2317, 4294901760
  %v2417 = vsub.f32 %v2317, %v2416
  %v2418 = vand.u32 %v2417, 4294901760
  %v2419 = vsub.f32 %v2417, %v2418
  %v2420 = vand.u32 %v2419, 4294901760
  %2421 = vmatpush1.xpose.msra.mxu0 %v2420
  %2422 = vmatprep.subr.mxu0 0.0
  %v2423 = vand.u32 %v2320, 4294901760
  %v2424 = vsub.f32 %v2320, %v2423
  %v2425 = vand.u32 %v2424, 4294901760
  %v2426 = vsub.f32 %v2424, %v2425
  %v2427 = vand.u32 %v2426, 4294901760
  %2428 = vmatpush1.xpose.msra.mxu0 %v2427
  %2429 = vmatprep.subr.mxu0 0.0
  %2430 = vmatpush1.xpose.msra.mxu0 0.0
  %2431 = vmatprep.subr.mxu0 0.0
  %2432 = vmatpush1.xpose.msra.mxu0 0.0
  %2433 = vmatprep.subr.mxu0 0.0
  %2434 = vmatpush1.xpose.msra.mxu0 0.0
  %2435 = vmatprep.subr.mxu0 0.0
  %2436 = vmatpush1.xpose.msra.mxu0 0.0
  %2437 = vmatprep.subr.mxu0 0.0
  %2438 = vmatpush1.xpose.msra.mxu0 0.0
  %2439 = vmatprep.subr.mxu0 0.0
  %2440 = vmatpush1.xpose.msra.mxu0 0.0
  %2441 = vmatprep.subr.mxu0 0.0
  %2442 = vmatpush1.xpose.msra.mxu0 0.0
  %2443 = vmatprep.subr.mxu0 0.0
  %2444 = vmatpush1.xpose.msra.mxu0 0.0
  %2445 = vmatprep.subr.mxu0 0.0
  %2446 = vmatpush1.xpose.msra.mxu0 0.0
  %2447 = vmatprep.subr.mxu0 0.0
  %2448 = vmatpush1.xpose.msra.mxu0 0.0
  %2449 = vmatprep.subr.mxu0 0.0
  %2450 = vmatpush1.xpose.msra.mxu0 0.0
  %2451 = vmatprep.subr.mxu0 0.0
  %2452 = vmatpush1.xpose.msra.mxu0 0.0
  %2453 = vmatprep.subr.mxu0 0.0
  %2454 = vmatpush1.xpose.msra.mxu0 0.0
  %2455 = vmatprep.subr.mxu0 0.0
  %2456 = vmatpush1.xpose.msra.mxu0 0.0
  %2457 = vmatprep.subr.mxu0 0.0
  %2458 = vmatpush1.xpose.msra.mxu0 0.0
  %2459 = vmatprep.subr.mxu0 0.0
  %2460 = vmatpush1.xpose.msra.mxu0 0.0
  %2461 = vmatprep.subr.mxu0 0.0
  %2462 = vmatpush1.xpose.msra.mxu0 0.0
  %2463 = vmatprep.subr.mxu0 0.0
  %2464 = vmatpush1.xpose.msra.mxu0 0.0
  %2465 = vmatprep.subr.mxu0 0.0
  %2466 = vmatpush1.xpose.msra.mxu0 0.0
  %2467 = vmatprep.subr.mxu0 0.0
  %2468 = vmatpush1.xpose.msra.mxu0 0.0
  %2469 = vmatprep.subr.mxu0 0.0
  %2470 = vmatpush1.xpose.msra.mxu0 0.0
  %2471 = vmatprep.subr.mxu0 0.0
  %2472 = vmatpush1.xpose.msra.mxu0 0.0
  %2473 = vmatprep.subr.mxu0 0.0
  %2474 = vmatpush1.xpose.msra.mxu0 0.0
  %2475 = vmatprep.subr.mxu0 0.0
  %2476 = vmatpush1.xpose.msra.mxu0 0.0
  %2477 = vmatprep.subr.mxu0 0.0
  %2478 = vmatpush1.xpose.msra.mxu0 0.0
  %2479 = vmatprep.subr.mxu0 0.0
  %2480 = vmatpush1.xpose.msra.mxu0 0.0
  %2481 = vmatprep.subr.mxu0 0.0
  %2482 = vmatpush1.xpose.msra.mxu0 0.0
  %2483 = vmatprep.subr.mxu0 0.0
  %2484 = vmatpush1.xpose.msra.mxu0 0.0
  %2485 = vmatprep.mubr.f32.mxu0 0.0
  %v2486 = vand.u32 %v2308, 4294901760
  %2487 = vmatmul.mubr.f32.gmra.mrb[0].mxu0 %v2486
  %v2488 = vpop.f32.mrb[0].mxu0
  %v2489 = vadd.f32 %v2398, %v2488
  %v2490 = vpop.f32.mrb[0].mxu0
  %2491 = vdwg.mxu0
  %2492 = vmatprep.subr.mxu0 0.0
  %v2493 = vand.u32 %v2311, 4294901760
  %v2494 = vsub.f32 %v2311, %v2493
  %2495 = vmatpush1.xpose.msra.mxu0 %v2494
  %2496 = vmatprep.subr.mxu0 0.0
  %v2497 = vand.u32 %v2314, 4294901760
  %v2498 = vsub.f32 %v2314, %v2497
  %2499 = vmatpush1.xpose.msra.mxu0 %v2498
  %2500 = vmatprep.subr.mxu0 0.0
  %v2501 = vand.u32 %v2317, 4294901760
  %v2502 = vsub.f32 %v2317, %v2501
  %2503 = vmatpush1.xpose.msra.mxu0 %v2502
  %2504 = vmatprep.subr.mxu0 0.0
  %v2505 = vand.u32 %v2320, 4294901760
  %v2506 = vsub.f32 %v2320, %v2505
  %2507 = vmatpush1.xpose.msra.mxu0 %v2506
  %2508 = vmatprep.subr.mxu0 0.0
  %2509 = vmatpush1.xpose.msra.mxu0 0.0
  %2510 = vmatprep.subr.mxu0 0.0
  %2511 = vmatpush1.xpose.msra.mxu0 0.0
  %2512 = vmatprep.subr.mxu0 0.0
  %2513 = vmatpush1.xpose.msra.mxu0 0.0
  %2514 = vmatprep.subr.mxu0 0.0
  %2515 = vmatpush1.xpose.msra.mxu0 0.0
  %2516 = vmatprep.subr.mxu0 0.0
  %2517 = vmatpush1.xpose.msra.mxu0 0.0
  %2518 = vmatprep.subr.mxu0 0.0
  %2519 = vmatpush1.xpose.msra.mxu0 0.0
  %2520 = vmatprep.subr.mxu0 0.0
  %2521 = vmatpush1.xpose.msra.mxu0 0.0
  %2522 = vmatprep.subr.mxu0 0.0
  %2523 = vmatpush1.xpose.msra.mxu0 0.0
  %2524 = vmatprep.subr.mxu0 0.0
  %2525 = vmatpush1.xpose.msra.mxu0 0.0
  %2526 = vmatprep.subr.mxu0 0.0
  %2527 = vmatpush1.xpose.msra.mxu0 0.0
  %2528 = vmatprep.subr.mxu0 0.0
  %2529 = vmatpush1.xpose.msra.mxu0 0.0
  %2530 = vmatprep.subr.mxu0 0.0
  %2531 = vmatpush1.xpose.msra.mxu0 0.0
  %2532 = vmatprep.subr.mxu0 0.0
  %2533 = vmatpush1.xpose.msra.mxu0 0.0
  %2534 = vmatprep.subr.mxu0 0.0
  %2535 = vmatpush1.xpose.msra.mxu0 0.0
  %2536 = vmatprep.subr.mxu0 0.0
  %2537 = vmatpush1.xpose.msra.mxu0 0.0
  %2538 = vmatprep.subr.mxu0 0.0
  %2539 = vmatpush1.xpose.msra.mxu0 0.0
  %2540 = vmatprep.subr.mxu0 0.0
  %2541 = vmatpush1.xpose.msra.mxu0 0.0
  %2542 = vmatprep.subr.mxu0 0.0
  %2543 = vmatpush1.xpose.msra.mxu0 0.0
  %2544 = vmatprep.subr.mxu0 0.0
  %2545 = vmatpush1.xpose.msra.mxu0 0.0
  %2546 = vmatprep.subr.mxu0 0.0
  %2547 = vmatpush1.xpose.msra.mxu0 0.0
  %2548 = vmatprep.subr.mxu0 0.0
  %2549 = vmatpush1.xpose.msra.mxu0 0.0
  %2550 = vmatprep.subr.mxu0 0.0
  %2551 = vmatpush1.xpose.msra.mxu0 0.0
  %2552 = vmatprep.subr.mxu0 0.0
  %2553 = vmatpush1.xpose.msra.mxu0 0.0
  %2554 = vmatprep.subr.mxu0 0.0
  %2555 = vmatpush1.xpose.msra.mxu0 0.0
  %2556 = vmatprep.subr.mxu0 0.0
  %2557 = vmatpush1.xpose.msra.mxu0 0.0
  %2558 = vmatprep.subr.mxu0 0.0
  %2559 = vmatpush1.xpose.msra.mxu0 0.0
  %2560 = vmatprep.subr.mxu0 0.0
  %2561 = vmatpush1.xpose.msra.mxu0 0.0
  %2562 = vmatprep.subr.mxu0 0.0
  %2563 = vmatpush1.xpose.msra.mxu0 0.0
  %2564 = vmatprep.mubr.f32.mxu0 0.0
  %v2565 = vand.u32 %v2308, 4294901760
  %v2566 = vsub.f32 %v2308, %v2565
  %2567 = vmatmul.mubr.f32.gmra.mrb[0].mxu0 %v2566
  %v2568 = vpop.f32.mrb[0].mxu0
  %v2569 = vadd.f32 %v2489, %v2568
  %v2570 = vpop.f32.mrb[0].mxu0
  %2571 = vdwg.mxu0
  %2572 = vmatprep.subr.mxu0 0.0
  %v2573 = vand.u32 %v2311, 4294901760
  %2574 = vmatpush1.xpose.msra.mxu0 %v2573
  %2575 = vmatprep.subr.mxu0 0.0
  %v2576 = vand.u32 %v2314, 4294901760
  %2577 = vmatpush1.xpose.msra.mxu0 %v2576
  %2578 = vmatprep.subr.mxu0 0.0
  %v2579 = vand.u32 %v2317, 4294901760
  %2580 = vmatpush1.xpose.msra.mxu0 %v2579
  %2581 = vmatprep.subr.mxu0 0.0
  %v2582 = vand.u32 %v2320, 4294901760
  %2583 = vmatpush1.xpose.msra.mxu0 %v2582
  %2584 = vmatprep.subr.mxu0 0.0
  %2585 = vmatpush1.xpose.msra.mxu0 0.0
  %2586 = vmatprep.subr.mxu0 0.0
  %2587 = vmatpush1.xpose.msra.mxu0 0.0
  %2588 = vmatprep.subr.mxu0 0.0
  %2589 = vmatpush1.xpose.msra.mxu0 0.0
  %2590 = vmatprep.subr.mxu0 0.0
  %2591 = vmatpush1.xpose.msra.mxu0 0.0
  %2592 = vmatprep.subr.mxu0 0.0
  %2593 = vmatpush1.xpose.msra.mxu0 0.0
  %2594 = vmatprep.subr.mxu0 0.0
  %2595 = vmatpush1.xpose.msra.mxu0 0.0
  %2596 = vmatprep.subr.mxu0 0.0
  %2597 = vmatpush1.xpose.msra.mxu0 0.0
  %2598 = vmatprep.subr.mxu0 0.0
  %2599 = vmatpush1.xpose.msra.mxu0 0.0
  %2600 = vmatprep.subr.mxu0 0.0
  %2601 = vmatpush1.xpose.msra.mxu0 0.0
  %2602 = vmatprep.subr.mxu0 0.0
  %2603 = vmatpush1.xpose.msra.mxu0 0.0
  %2604 = vmatprep.subr.mxu0 0.0
  %2605 = vmatpush1.xpose.msra.mxu0 0.0
  %2606 = vmatprep.subr.mxu0 0.0
  %2607 = vmatpush1.xpose.msra.mxu0 0.0
  %2608 = vmatprep.subr.mxu0 0.0
  %2609 = vmatpush1.xpose.msra.mxu0 0.0
  %2610 = vmatprep.subr.mxu0 0.0
  %2611 = vmatpush1.xpose.msra.mxu0 0.0
  %2612 = vmatprep.subr.mxu0 0.0
  %2613 = vmatpush1.xpose.msra.mxu0 0.0
  %2614 = vmatprep.subr.mxu0 0.0
  %2615 = vmatpush1.xpose.msra.mxu0 0.0
  %2616 = vmatprep.subr.mxu0 0.0
  %2617 = vmatpush1.xpose.msra.mxu0 0.0
  %2618 = vmatprep.subr.mxu0 0.0
  %2619 = vmatpush1.xpose.msra.mxu0 0.0
  %2620 = vmatprep.subr.mxu0 0.0
  %2621 = vmatpush1.xpose.msra.mxu0 0.0
  %2622 = vmatprep.subr.mxu0 0.0
  %2623 = vmatpush1.xpose.msra.mxu0 0.0
  %2624 = vmatprep.subr.mxu0 0.0
  %2625 = vmatpush1.xpose.msra.mxu0 0.0
  %2626 = vmatprep.subr.mxu0 0.0
  %2627 = vmatpush1.xpose.msra.mxu0 0.0
  %2628 = vmatprep.subr.mxu0 0.0
  %2629 = vmatpush1.xpose.msra.mxu0 0.0
  %2630 = vmatprep.subr.mxu0 0.0
  %2631 = vmatpush1.xpose.msra.mxu0 0.0
  %2632 = vmatprep.subr.mxu0 0.0
  %2633 = vmatpush1.xpose.msra.mxu0 0.0
  %2634 = vmatprep.subr.mxu0 0.0
  %2635 = vmatpush1.xpose.msra.mxu0 0.0
  %2636 = vmatprep.subr.mxu0 0.0
  %2637 = vmatpush1.xpose.msra.mxu0 0.0
  %2638 = vmatprep.subr.mxu0 0.0
  %2639 = vmatpush1.xpose.msra.mxu0 0.0
  %2640 = vmatprep.mubr.f32.mxu0 0.0
  %v2641 = vand.u32 %v2308, 4294901760
  %v2642 = vsub.f32 %v2308, %v2641
  %v2643 = vand.u32 %v2642, 4294901760
  %2644 = vmatmul.mubr.f32.gmra.mrb[0].mxu0 %v2643
  %v2645 = vpop.f32.mrb[0].mxu0
  %v2646 = vadd.f32 %v2569, %v2645
  %v2647 = vpop.f32.mrb[0].mxu0
  %2648 = vdwg.mxu0
  %2649 = vmatprep.subr.mxu0 0.0
  %v2650 = vand.u32 %v2311, 4294901760
  %v2651 = vsub.f32 %v2311, %v2650
  %v2652 = vand.u32 %v2651, 4294901760
  %2653 = vmatpush1.xpose.msra.mxu0 %v2652
  %2654 = vmatprep.subr.mxu0 0.0
  %v2655 = vand.u32 %v2314, 4294901760
  %v2656 = vsub.f32 %v2314, %v2655
  %v2657 = vand.u32 %v2656, 4294901760
  %2658 = vmatpush1.xpose.msra.mxu0 %v2657
  %2659 = vmatprep.subr.mxu0 0.0
  %v2660 = vand.u32 %v2317, 4294901760
  %v2661 = vsub.f32 %v2317, %v2660
  %v2662 = vand.u32 %v2661, 4294901760
  %2663 = vmatpush1.xpose.msra.mxu0 %v2662
  %2664 = vmatprep.subr.mxu0 0.0
  %v2665 = vand.u32 %v2320, 4294901760
  %v2666 = vsub.f32 %v2320, %v2665
  %v2667 = vand.u32 %v2666, 4294901760
  %2668 = vmatpush1.xpose.msra.mxu0 %v2667
  %2669 = vmatprep.subr.mxu0 0.0
  %2670 = vmatpush1.xpose.msra.mxu0 0.0
  %2671 = vmatprep.subr.mxu0 0.0
  %2672 = vmatpush1.xpose.msra.mxu0 0.0
  %2673 = vmatprep.subr.mxu0 0.0
  %2674 = vmatpush1.xpose.msra.mxu0 0.0
  %2675 = vmatprep.subr.mxu0 0.0
  %2676 = vmatpush1.xpose.msra.mxu0 0.0
  %2677 = vmatprep.subr.mxu0 0.0
  %2678 = vmatpush1.xpose.msra.mxu0 0.0
  %2679 = vmatprep.subr.mxu0 0.0
  %2680 = vmatpush1.xpose.msra.mxu0 0.0
  %2681 = vmatprep.subr.mxu0 0.0
  %2682 = vmatpush1.xpose.msra.mxu0 0.0
  %2683 = vmatprep.subr.mxu0 0.0
  %2684 = vmatpush1.xpose.msra.mxu0 0.0
  %2685 = vmatprep.subr.mxu0 0.0
  %2686 = vmatpush1.xpose.msra.mxu0 0.0
  %2687 = vmatprep.subr.mxu0 0.0
  %2688 = vmatpush1.xpose.msra.mxu0 0.0
  %2689 = vmatprep.subr.mxu0 0.0
  %2690 = vmatpush1.xpose.msra.mxu0 0.0
  %2691 = vmatprep.subr.mxu0 0.0
  %2692 = vmatpush1.xpose.msra.mxu0 0.0
  %2693 = vmatprep.subr.mxu0 0.0
  %2694 = vmatpush1.xpose.msra.mxu0 0.0
  %2695 = vmatprep.subr.mxu0 0.0
  %2696 = vmatpush1.xpose.msra.mxu0 0.0
  %2697 = vmatprep.subr.mxu0 0.0
  %2698 = vmatpush1.xpose.msra.mxu0 0.0
  %2699 = vmatprep.subr.mxu0 0.0
  %2700 = vmatpush1.xpose.msra.mxu0 0.0
  %2701 = vmatprep.subr.mxu0 0.0
  %2702 = vmatpush1.xpose.msra.mxu0 0.0
  %2703 = vmatprep.subr.mxu0 0.0
  %2704 = vmatpush1.xpose.msra.mxu0 0.0
  %2705 = vmatprep.subr.mxu0 0.0
  %2706 = vmatpush1.xpose.msra.mxu0 0.0
  %2707 = vmatprep.subr.mxu0 0.0
  %2708 = vmatpush1.xpose.msra.mxu0 0.0
  %2709 = vmatprep.subr.mxu0 0.0
  %2710 = vmatpush1.xpose.msra.mxu0 0.0
  %2711 = vmatprep.subr.mxu0 0.0
  %2712 = vmatpush1.xpose.msra.mxu0 0.0
  %2713 = vmatprep.subr.mxu0 0.0
  %2714 = vmatpush1.xpose.msra.mxu0 0.0
  %2715 = vmatprep.subr.mxu0 0.0
  %2716 = vmatpush1.xpose.msra.mxu0 0.0
  %2717 = vmatprep.subr.mxu0 0.0
  %2718 = vmatpush1.xpose.msra.mxu0 0.0
  %2719 = vmatprep.subr.mxu0 0.0
  %2720 = vmatpush1.xpose.msra.mxu0 0.0
  %2721 = vmatprep.subr.mxu0 0.0
  %2722 = vmatpush1.xpose.msra.mxu0 0.0
  %2723 = vmatprep.subr.mxu0 0.0
  %2724 = vmatpush1.xpose.msra.mxu0 0.0
  %2725 = vmatprep.mubr.f32.mxu0 0.0
  %v2726 = vand.u32 %v2308, 4294901760
  %2727 = vmatmul.mubr.f32.gmra.mrb[0].mxu0 %v2726
  %v2728 = vpop.f32.mrb[0].mxu0
  %v2729 = vadd.f32 %v2646, %v2728
  %v2730 = vpop.f32.mrb[0].mxu0
  %2731 = vdwg.mxu0
  %2732 = vmatprep.subr.mxu0 0.0
  %v2733 = vand.u32 %v2311, 4294901760
  %2734 = vmatpush1.xpose.msra.mxu0 %v2733
  %2735 = vmatprep.subr.mxu0 0.0
  %v2736 = vand.u32 %v2314, 4294901760
  %2737 = vmatpush1.xpose.msra.mxu0 %v2736
  %2738 = vmatprep.subr.mxu0 0.0
  %v2739 = vand.u32 %v2317, 4294901760
  %2740 = vmatpush1.xpose.msra.mxu0 %v2739
  %2741 = vmatprep.subr.mxu0 0.0
  %v2742 = vand.u32 %v2320, 4294901760
  %2743 = vmatpush1.xpose.msra.mxu0 %v2742
  %2744 = vmatprep.subr.mxu0 0.0
  %2745 = vmatpush1.xpose.msra.mxu0 0.0
  %2746 = vmatprep.subr.mxu0 0.0
  %2747 = vmatpush1.xpose.msra.mxu0 0.0
  %2748 = vmatprep.subr.mxu0 0.0
  %2749 = vmatpush1.xpose.msra.mxu0 0.0
  %2750 = vmatprep.subr.mxu0 0.0
  %2751 = vmatpush1.xpose.msra.mxu0 0.0
  %2752 = vmatprep.subr.mxu0 0.0
  %2753 = vmatpush1.xpose.msra.mxu0 0.0
  %2754 = vmatprep.subr.mxu0 0.0
  %2755 = vmatpush1.xpose.msra.mxu0 0.0
  %2756 = vmatprep.subr.mxu0 0.0
  %2757 = vmatpush1.xpose.msra.mxu0 0.0
  %2758 = vmatprep.subr.mxu0 0.0
  %2759 = vmatpush1.xpose.msra.mxu0 0.0
  %2760 = vmatprep.subr.mxu0 0.0
  %2761 = vmatpush1.xpose.msra.mxu0 0.0
  %2762 = vmatprep.subr.mxu0 0.0
  %2763 = vmatpush1.xpose.msra.mxu0 0.0
  %2764 = vmatprep.subr.mxu0 0.0
  %2765 = vmatpush1.xpose.msra.mxu0 0.0
  %2766 = vmatprep.subr.mxu0 0.0
  %2767 = vmatpush1.xpose.msra.mxu0 0.0
  %2768 = vmatprep.subr.mxu0 0.0
  %2769 = vmatpush1.xpose.msra.mxu0 0.0
  %2770 = vmatprep.subr.mxu0 0.0
  %2771 = vmatpush1.xpose.msra.mxu0 0.0
  %2772 = vmatprep.subr.mxu0 0.0
  %2773 = vmatpush1.xpose.msra.mxu0 0.0
  %2774 = vmatprep.subr.mxu0 0.0
  %2775 = vmatpush1.xpose.msra.mxu0 0.0
  %2776 = vmatprep.subr.mxu0 0.0
  %2777 = vmatpush1.xpose.msra.mxu0 0.0
  %2778 = vmatprep.subr.mxu0 0.0
  %2779 = vmatpush1.xpose.msra.mxu0 0.0
  %2780 = vmatprep.subr.mxu0 0.0
  %2781 = vmatpush1.xpose.msra.mxu0 0.0
  %2782 = vmatprep.subr.mxu0 0.0
  %2783 = vmatpush1.xpose.msra.mxu0 0.0
  %2784 = vmatprep.subr.mxu0 0.0
  %2785 = vmatpush1.xpose.msra.mxu0 0.0
  %2786 = vmatprep.subr.mxu0 0.0
  %2787 = vmatpush1.xpose.msra.mxu0 0.0
  %2788 = vmatprep.subr.mxu0 0.0
  %2789 = vmatpush1.xpose.msra.mxu0 0.0
  %2790 = vmatprep.subr.mxu0 0.0
  %2791 = vmatpush1.xpose.msra.mxu0 0.0
  %2792 = vmatprep.subr.mxu0 0.0
  %2793 = vmatpush1.xpose.msra.mxu0 0.0
  %2794 = vmatprep.subr.mxu0 0.0
  %2795 = vmatpush1.xpose.msra.mxu0 0.0
  %2796 = vmatprep.subr.mxu0 0.0
  %2797 = vmatpush1.xpose.msra.mxu0 0.0
  %2798 = vmatprep.subr.mxu0 0.0
  %2799 = vmatpush1.xpose.msra.mxu0 0.0
  %2800 = vmatprep.mubr.f32.mxu0 0.0
  %v2801 = vand.u32 %v2308, 4294901760
  %2802 = vmatmul.mubr.f32.gmra.mrb[0].mxu0 %v2801
  %v2803 = vpop.f32.mrb[0].mxu0
  %v2804 = vadd.f32 %v2729, %v2803
  %v2805 = vpop.f32.mrb[0].mxu0
  %2806 = vdwg.mxu0
  %vm2807 = vcmask 257024
  %2808 = vst.msk [vmem:[%s5] sm:$0xf] %vm2807, %v2804
  // Predicated region
  $region22: #{sc3_block_pallas.1} parent=0 // pred_check
    _
  $region23: #{sc3_block_pallas.1} parent=0 // pred_check_branch
    %2810 = sbr.rel (0) target = $region25
  $region24: #{sc3_block_pallas.1} parent=0 // pred_region
    _
  $region25: #{sc3_block_pallas.1} parent=0 // pred_fallthru
    _
  // Predicated region
  $region26: #{sc3_block_pallas.1} parent=0 // pred_check
    _
  $region27: #{sc3_block_pallas.1} parent=0 // pred_check_branch
    %2812 = sbr.rel (0) target = $region29
  $region28: #{sc3_block_pallas.1} parent=0 // pred_region
    _
  $region29: #{sc3_block_pallas.1} parent=0 // pred_fallthru
    _

</llo_original>
